<compile_context>
chip_gen: v5e
topology: v5e:2x2
jax: 0.10.0
libtpu: 0.0.40
codegen_flags: <defaults>
</compile_context>

<pallas_src>
import functools
import math

import jax
import jax.numpy as jnp
from jax import lax
from jax.experimental import pallas as pl
from jax.experimental.pallas import tpu as pltpu


def _leaky_relu(x, slope=0.2):
    return jnp.where(x > 0, x, slope * x)


def encode_layer_kernel(x_ref,
                        wqkv_ref, bqkv_ref,
                        wo_ref, bo_ref,
                        w1_ref, b1_ref,
                        w2_ref, b2_ref,
                        o_ref,
                        *, num_heads, seq_len, batch_tile):
    # x_ref block: (batch_tile * seq_len, E) — batch elements flattened into rows
    # so every matmul sees a tall M dimension and output stores are dense.
    x = x_ref[...]                                       # (R, E) f32
    R, E = x.shape
    Dh = E // num_heads
    scale = 1.0 / math.sqrt(Dh)

    # ---- fused QKV projection (weights pre-packed & pre-transposed in wrapper) ----
    # wqkv: (E, 3E), bqkv: (1, 3E) -> one wide MXU pass instead of three narrow ones.
    qkv = jnp.dot(x, wqkv_ref[...], preferred_element_type=jnp.float32) + bqkv_ref[...]
    q = qkv[:, :E] * scale                               # fold 1/sqrt(Dh) into q once
    k = qkv[:, E:2 * E]
    v = qkv[:, 2 * E:]

    # ---- attention: static loops over batch elements and heads (all tiny, unrolled) ----
    ctx_rows = []
    for b in range(batch_tile):
        r0 = b * seq_len
        qb = q[r0:r0 + seq_len]                          # (S, E)
        kb = k[r0:r0 + seq_len]
        vb = v[r0:r0 + seq_len]
        head_ctx = []
        for h in range(num_heads):
            c0 = h * Dh
            qh = qb[:, c0:c0 + Dh]                       # (S, Dh)
            kh = kb[:, c0:c0 + Dh]
            vh = vb[:, c0:c0 + Dh]
            # q @ k^T without materializing a transpose: contract last dims.
            s = lax.dot_general(qh, kh, (((1,), (1,)), ((), ())),
                                preferred_element_type=jnp.float32)    # (S, S)
            s = s - jnp.max(s, axis=-1, keepdims=True)
            p = jnp.exp(s)
            p = p * pl.reciprocal(jnp.sum(p, axis=-1, keepdims=True), approx=False)
            head_ctx.append(jnp.dot(p, vh, preferred_element_type=jnp.float32))
        ctx_rows.append(jnp.concatenate(head_ctx, axis=-1))             # (S, E)
    ctx = ctx_rows[0] if batch_tile == 1 else jnp.concatenate(ctx_rows, axis=0)

    # ---- output projection + residual 1 ----
    attn_out = jnp.dot(ctx, wo_ref[...], preferred_element_type=jnp.float32) + bo_ref[...]
    x1 = attn_out + x                                    # (R, E)

    # ---- feed-forward (Linear -> LeakyReLU -> Linear -> LeakyReLU) + residual 2 ----
    h1 = _leaky_relu(jnp.dot(x1, w1_ref[...], preferred_element_type=jnp.float32)
                     + b1_ref[...])
    h2 = _leaky_relu(jnp.dot(h1, w2_ref[...], preferred_element_type=jnp.float32)
                     + b2_ref[...])
    o_ref[...] = (x1 + h2).astype(o_ref.dtype)


def encode_layer(x, params, *, num_heads, batch_tile=None):
    """x: (B, S, E) float32.  params: dict of weights (see init_params)."""
    B, S, E = x.shape
    assert E % num_heads == 0, "embed_dim must be divisible by num_heads"

    # Pick a batch tile so each grid step processes >= ~128 rows (MXU friendly),
    # collapsing to a single grid step for small batches.
    if batch_tile is None:
        batch_tile = max(1, min(B, pl.cdiv(128, S)))
    while B % batch_tile != 0:
        batch_tile -= 1
    grid = (B // batch_tile,)
    rows = batch_tile * S

    # Pre-pack / pre-transpose weights ONCE outside the kernel: (in, out) layout.
    wqkv = jnp.concatenate([params["wq"], params["wk"], params["wv"]], axis=0).T  # (E, 3E)
    bqkv = jnp.concatenate([params["bq"], params["bk"], params["bv"]], axis=1)    # (1, 3E)
    wo_t = params["wo"].T                                                         # (E, E)
    w1_t = params["w1"].T                                                         # (E, 8E)
    w2_t = params["w2"].T                                                         # (8E, E)

    weight_args = (wqkv, bqkv, wo_t, params["bo"], w1_t, params["b1"],
                   w2_t, params["b2"])

    def full_spec(arr):
        nd = arr.ndim
        # Constant index map: the block never changes, so it is fetched once and
        # stays resident in VMEM across all grid steps.
        return pl.BlockSpec(arr.shape, lambda g, _nd=nd: (0,) * _nd)

    # Flatten batch into rows once (free in XLA); kernel works on 2-D slabs.
    xf = x.reshape(B * S, E)

    kernel = functools.partial(encode_layer_kernel, num_heads=num_heads,
                               seq_len=S, batch_tile=batch_tile)

    out = pl.pallas_call(
        kernel,
        out_shape=jax.ShapeDtypeStruct((B * S, E), x.dtype),
        grid_spec=pltpu.PrefetchScalarGridSpec(
            num_scalar_prefetch=0,
            grid=grid,
            in_specs=[pl.BlockSpec((rows, E), lambda g: (g, 0))]
                     + [full_spec(w) for w in weight_args],
            out_specs=pl.BlockSpec((rows, E), lambda g: (g, 0)),
        ),
        compiler_params=pltpu.CompilerParams(
            dimension_semantics=("parallel",)),
    )(xf, *weight_args)
    return out.reshape(B, S, E)


def init_params(key, n_ch, n_heads):
    """Deterministic synthetic parameters, matching nn.MultiheadAttention / nn.Linear shapes."""
    ks = jax.random.split(key, 8)
    E = n_ch
    s = 0.1
    # nn.MultiheadAttention: in_proj_weight (3E, E), in_proj_bias (3E,) -> split q/k/v
    wq = s * jax.random.normal(ks[0], (E, E), jnp.float32)
    wk = s * jax.random.normal(ks[1], (E, E), jnp.float32)
    wv = s * jax.random.normal(ks[2], (E, E), jnp.float32)
    bq = s * jax.random.normal(ks[3], (1, E), jnp.float32)
    bk = s * jax.random.normal(ks[4], (1, E), jnp.float32)
    bv = s * jax.random.normal(ks[5], (1, E), jnp.float32)
    # out_proj: Linear(E, E)
    wo = s * jax.random.normal(ks[6], (E, E), jnp.float32)
    bo = jnp.zeros((1, E), jnp.float32)
    # FF: Linear(E, 8E), Linear(8E, E)
    k7a, k7b, k7c, k7d = jax.random.split(ks[7], 4)
    w1 = s * jax.random.normal(k7a, (8 * E, E), jnp.float32)
    b1 = s * jax.random.normal(k7b, (1, 8 * E), jnp.float32)
    w2 = s * jax.random.normal(k7c, (E, 8 * E), jnp.float32)
    b2 = s * jax.random.normal(k7d, (1, E), jnp.float32)
    return dict(wq=wq, bq=bq, wk=wk, bk=bk, wv=wv, bv=bv, wo=wo, bo=bo,
                w1=w1, b1=b1, w2=w2, b2=b2)


def encode_layer_ref(x, p, *, num_heads):
    """Pure-JAX reference for validation (mirrors PyTorch nn.MultiheadAttention math)."""
    B, S, E = x.shape
    Dh = E // num_heads
    scale = 1.0 / math.sqrt(Dh)
    q = x @ p["wq"].T + p["bq"]
    k = x @ p["wk"].T + p["bk"]
    v = x @ p["wv"].T + p["bv"]
    qh = q.reshape(B, S, num_heads, Dh).transpose(0, 2, 1, 3)
    kh = k.reshape(B, S, num_heads, Dh).transpose(0, 2, 1, 3)
    vh = v.reshape(B, S, num_heads, Dh).transpose(0, 2, 1, 3)
    s_ = jnp.einsum("bhqd,bhkd->bhqk", qh, kh) * scale
    pattn = jax.nn.softmax(s_, axis=-1)
    ctx = jnp.einsum("bhqk,bhkd->bhqd", pattn, vh)
    ctx = ctx.transpose(0, 2, 1, 3).reshape(B, S, E)
    attn_out = ctx @ p["wo"].T + p["bo"]
    x1 = attn_out + x
    h1 = jax.nn.leaky_relu(x1 @ p["w1"].T + p["b1"], negative_slope=0.2)
    h2 = jax.nn.leaky_relu(h1 @ p["w2"].T + p["b2"], negative_slope=0.2)
    return x1 + h2


if __name__ == "__main__":
    B, S, E, H = 2, 8, 32, 8   # batch=2, seq=8, channels=32, heads=8 (head_dim=4)
    key = jax.random.PRNGKey(0)
    kx, kp = jax.random.split(key)
    x = jax.random.normal(kx, (B, S, E), jnp.float32)
    params = init_params(kp, E, H)

    out = jax.block_until_ready(encode_layer(x, params, num_heads=H))
    ref = encode_layer_ref(x, params, num_heads=H)

    assert out.shape == (B, S, E)
    assert jnp.allclose(out, ref, atol=1e-4, rtol=1e-4), "Pallas kernel mismatch vs reference"
    print("KERNEL_OK")
</pallas_src>

<mosaic_0001>
module attributes {stable_mosaic.version = 11 : i64} {
  func.func @encode_layer_kernel(%arg0: i32, %arg1: memref<16x32xf32, #tpu.memory_space<vmem>>, %arg2: memref<32x96xf32, #tpu.memory_space<vmem>>, %arg3: memref<1x96xf32, #tpu.memory_space<vmem>>, %arg4: memref<32x32xf32, #tpu.memory_space<vmem>>, %arg5: memref<1x32xf32, #tpu.memory_space<vmem>>, %arg6: memref<32x256xf32, #tpu.memory_space<vmem>>, %arg7: memref<1x256xf32, #tpu.memory_space<vmem>>, %arg8: memref<256x32xf32, #tpu.memory_space<vmem>>, %arg9: memref<1x32xf32, #tpu.memory_space<vmem>>, %arg10: memref<16x32xf32, #tpu.memory_space<vmem>>) attributes {dimension_semantics = [#tpu.dimension_semantics<parallel>], iteration_bounds = array<i64: 1>, scalar_prefetch = 0 : i64, scratch_operands = 0 : i64, tpu.core_type = #tpu.core_type<tc>, window_params = [{transform_indices = @transform_0, window_bounds = array<i64: 16, 32>}, {pipeline_mode = #tpu.pipeline_mode<synchronous>, transform_indices = @transform_1, window_bounds = array<i64: 32, 96>}, {pipeline_mode = #tpu.pipeline_mode<synchronous>, transform_indices = @transform_2, window_bounds = array<i64: 1, 96>}, {pipeline_mode = #tpu.pipeline_mode<synchronous>, transform_indices = @transform_3, window_bounds = array<i64: 32, 32>}, {pipeline_mode = #tpu.pipeline_mode<synchronous>, transform_indices = @transform_4, window_bounds = array<i64: 1, 32>}, {pipeline_mode = #tpu.pipeline_mode<synchronous>, transform_indices = @transform_5, window_bounds = array<i64: 32, 256>}, {pipeline_mode = #tpu.pipeline_mode<synchronous>, transform_indices = @transform_6, window_bounds = array<i64: 1, 256>}, {pipeline_mode = #tpu.pipeline_mode<synchronous>, transform_indices = @transform_7, window_bounds = array<i64: 256, 32>}, {pipeline_mode = #tpu.pipeline_mode<synchronous>, transform_indices = @transform_8, window_bounds = array<i64: 1, 32>}, {transform_indices = @transform_9, window_bounds = array<i64: 16, 32>}]} {
    %c0 = arith.constant 0 : index
    %c0_0 = arith.constant 0 : index
    %0 = vector.load %arg1[%c0, %c0_0] : memref<16x32xf32, #tpu.memory_space<vmem>>, vector<16x32xf32>
    %c0_1 = arith.constant 0 : index
    %c0_2 = arith.constant 0 : index
    %1 = vector.load %arg2[%c0_1, %c0_2] : memref<32x96xf32, #tpu.memory_space<vmem>>, vector<32x96xf32>
    %cst = arith.constant dense<0.000000e+00> : vector<16x96xf32>
    %2 = tpu.matmul %0, %1, %cst {dimension_numbers = #tpu.dot_dimension_numbers<[1], [0], [0], [1], [0, 0, 1, 1], [], []>} : vector<16x32xf32>, vector<32x96xf32>, vector<16x96xf32> -> vector<16x96xf32>
    %c0_3 = arith.constant 0 : index
    %c0_4 = arith.constant 0 : index
    %3 = vector.load %arg3[%c0_3, %c0_4] : memref<1x96xf32, #tpu.memory_space<vmem>>, vector<1x96xf32>
    %4 = vector.broadcast %3 : vector<1x96xf32> to vector<16x96xf32>
    %5 = arith.addf %2, %4 : vector<16x96xf32>
    %6 = vector.extract_strided_slice %5 {offsets = [0, 0], sizes = [16, 32], strides = [1, 1]} : vector<16x96xf32> to vector<16x32xf32>
    %cst_5 = arith.constant 5.000000e-01 : f32
    %7 = vector.broadcast %cst_5 : f32 to vector<16x32xf32>
    %8 = arith.mulf %6, %7 : vector<16x32xf32>
    %9 = vector.extract_strided_slice %5 {offsets = [0, 32], sizes = [16, 32], strides = [1, 1]} : vector<16x96xf32> to vector<16x32xf32>
    %10 = vector.extract_strided_slice %5 {offsets = [0, 64], sizes = [16, 32], strides = [1, 1]} : vector<16x96xf32> to vector<16x32xf32>
    %11 = vector.extract_strided_slice %8 {offsets = [0, 0], sizes = [8, 32], strides = [1, 1]} : vector<16x32xf32> to vector<8x32xf32>
    %12 = vector.extract_strided_slice %9 {offsets = [0, 0], sizes = [8, 32], strides = [1, 1]} : vector<16x32xf32> to vector<8x32xf32>
    %13 = vector.extract_strided_slice %10 {offsets = [0, 0], sizes = [8, 32], strides = [1, 1]} : vector<16x32xf32> to vector<8x32xf32>
    %14 = vector.extract_strided_slice %11 {offsets = [0, 0], sizes = [8, 4], strides = [1, 1]} : vector<8x32xf32> to vector<8x4xf32>
    %15 = vector.extract_strided_slice %12 {offsets = [0, 0], sizes = [8, 4], strides = [1, 1]} : vector<8x32xf32> to vector<8x4xf32>
    %16 = vector.extract_strided_slice %13 {offsets = [0, 0], sizes = [8, 4], strides = [1, 1]} : vector<8x32xf32> to vector<8x4xf32>
    %cst_6 = arith.constant dense<0.000000e+00> : vector<8x8xf32>
    %17 = tpu.matmul %14, %15, %cst_6 {dimension_numbers = #tpu.dot_dimension_numbers<[1], [1], [0], [0], [0, 0, 1, 0], [], []>} : vector<8x4xf32>, vector<8x4xf32>, vector<8x8xf32> -> vector<8x8xf32>
    %cst_7 = arith.constant dense<0xFF800000> : vector<8xf32>
    %18 = vector.multi_reduction <maximumf>, %17, %cst_7 [1] : vector<8x8xf32> to vector<8xf32>
    %19 = vector.shape_cast %18 : vector<8xf32> to vector<8x1xf32>
    %20 = vector.broadcast %19 : vector<8x1xf32> to vector<8x8xf32>
    %21 = arith.subf %17, %20 : vector<8x8xf32>
    %22 = math.exp %21 : vector<8x8xf32>
    %cst_8 = arith.constant dense<0.000000e+00> : vector<8xf32>
    %23 = vector.multi_reduction <add>, %22, %cst_8 [1] : vector<8x8xf32> to vector<8xf32>
    %24 = vector.shape_cast %23 : vector<8xf32> to vector<8x1xf32>
    %25 = tpu.reciprocal %24 : vector<8x1xf32> -> vector<8x1xf32>
    %26 = vector.broadcast %25 : vector<8x1xf32> to vector<8x8xf32>
    %27 = arith.mulf %22, %26 : vector<8x8xf32>
    %cst_9 = arith.constant dense<0.000000e+00> : vector<8x4xf32>
    %28 = tpu.matmul %27, %16, %cst_9 {dimension_numbers = #tpu.dot_dimension_numbers<[1], [0], [0], [1], [0, 0, 1, 1], [], []>} : vector<8x8xf32>, vector<8x4xf32>, vector<8x4xf32> -> vector<8x4xf32>
    %29 = vector.extract_strided_slice %11 {offsets = [0, 4], sizes = [8, 4], strides = [1, 1]} : vector<8x32xf32> to vector<8x4xf32>
    %30 = vector.extract_strided_slice %12 {offsets = [0, 4], sizes = [8, 4], strides = [1, 1]} : vector<8x32xf32> to vector<8x4xf32>
    %31 = vector.extract_strided_slice %13 {offsets = [0, 4], sizes = [8, 4], strides = [1, 1]} : vector<8x32xf32> to vector<8x4xf32>
    %cst_10 = arith.constant dense<0.000000e+00> : vector<8x8xf32>
    %32 = tpu.matmul %29, %30, %cst_10 {dimension_numbers = #tpu.dot_dimension_numbers<[1], [1], [0], [0], [0, 0, 1, 0], [], []>} : vector<8x4xf32>, vector<8x4xf32>, vector<8x8xf32> -> vector<8x8xf32>
    %cst_11 = arith.constant dense<0xFF800000> : vector<8xf32>
    %33 = vector.multi_reduction <maximumf>, %32, %cst_11 [1] : vector<8x8xf32> to vector<8xf32>
    %34 = vector.shape_cast %33 : vector<8xf32> to vector<8x1xf32>
    %35 = vector.broadcast %34 : vector<8x1xf32> to vector<8x8xf32>
    %36 = arith.subf %32, %35 : vector<8x8xf32>
    %37 = math.exp %36 : vector<8x8xf32>
    %cst_12 = arith.constant dense<0.000000e+00> : vector<8xf32>
    %38 = vector.multi_reduction <add>, %37, %cst_12 [1] : vector<8x8xf32> to vector<8xf32>
    %39 = vector.shape_cast %38 : vector<8xf32> to vector<8x1xf32>
    %40 = tpu.reciprocal %39 : vector<8x1xf32> -> vector<8x1xf32>
    %41 = vector.broadcast %40 : vector<8x1xf32> to vector<8x8xf32>
    %42 = arith.mulf %37, %41 : vector<8x8xf32>
    %cst_13 = arith.constant dense<0.000000e+00> : vector<8x4xf32>
    %43 = tpu.matmul %42, %31, %cst_13 {dimension_numbers = #tpu.dot_dimension_numbers<[1], [0], [0], [1], [0, 0, 1, 1], [], []>} : vector<8x8xf32>, vector<8x4xf32>, vector<8x4xf32> -> vector<8x4xf32>
    %44 = vector.extract_strided_slice %11 {offsets = [0, 8], sizes = [8, 4], strides = [1, 1]} : vector<8x32xf32> to vector<8x4xf32>
    %45 = vector.extract_strided_slice %12 {offsets = [0, 8], sizes = [8, 4], strides = [1, 1]} : vector<8x32xf32> to vector<8x4xf32>
    %46 = vector.extract_strided_slice %13 {offsets = [0, 8], sizes = [8, 4], strides = [1, 1]} : vector<8x32xf32> to vector<8x4xf32>
    %cst_14 = arith.constant dense<0.000000e+00> : vector<8x8xf32>
    %47 = tpu.matmul %44, %45, %cst_14 {dimension_numbers = #tpu.dot_dimension_numbers<[1], [1], [0], [0], [0, 0, 1, 0], [], []>} : vector<8x4xf32>, vector<8x4xf32>, vector<8x8xf32> -> vector<8x8xf32>
    %cst_15 = arith.constant dense<0xFF800000> : vector<8xf32>
    %48 = vector.multi_reduction <maximumf>, %47, %cst_15 [1] : vector<8x8xf32> to vector<8xf32>
    %49 = vector.shape_cast %48 : vector<8xf32> to vector<8x1xf32>
    %50 = vector.broadcast %49 : vector<8x1xf32> to vector<8x8xf32>
    %51 = arith.subf %47, %50 : vector<8x8xf32>
    %52 = math.exp %51 : vector<8x8xf32>
    %cst_16 = arith.constant dense<0.000000e+00> : vector<8xf32>
    %53 = vector.multi_reduction <add>, %52, %cst_16 [1] : vector<8x8xf32> to vector<8xf32>
    %54 = vector.shape_cast %53 : vector<8xf32> to vector<8x1xf32>
    %55 = tpu.reciprocal %54 : vector<8x1xf32> -> vector<8x1xf32>
    %56 = vector.broadcast %55 : vector<8x1xf32> to vector<8x8xf32>
    %57 = arith.mulf %52, %56 : vector<8x8xf32>
    %cst_17 = arith.constant dense<0.000000e+00> : vector<8x4xf32>
    %58 = tpu.matmul %57, %46, %cst_17 {dimension_numbers = #tpu.dot_dimension_numbers<[1], [0], [0], [1], [0, 0, 1, 1], [], []>} : vector<8x8xf32>, vector<8x4xf32>, vector<8x4xf32> -> vector<8x4xf32>
    %59 = vector.extract_strided_slice %11 {offsets = [0, 12], sizes = [8, 4], strides = [1, 1]} : vector<8x32xf32> to vector<8x4xf32>
    %60 = vector.extract_strided_slice %12 {offsets = [0, 12], sizes = [8, 4], strides = [1, 1]} : vector<8x32xf32> to vector<8x4xf32>
    %61 = vector.extract_strided_slice %13 {offsets = [0, 12], sizes = [8, 4], strides = [1, 1]} : vector<8x32xf32> to vector<8x4xf32>
    %cst_18 = arith.constant dense<0.000000e+00> : vector<8x8xf32>
    %62 = tpu.matmul %59, %60, %cst_18 {dimension_numbers = #tpu.dot_dimension_numbers<[1], [1], [0], [0], [0, 0, 1, 0], [], []>} : vector<8x4xf32>, vector<8x4xf32>, vector<8x8xf32> -> vector<8x8xf32>
    %cst_19 = arith.constant dense<0xFF800000> : vector<8xf32>
    %63 = vector.multi_reduction <maximumf>, %62, %cst_19 [1] : vector<8x8xf32> to vector<8xf32>
    %64 = vector.shape_cast %63 : vector<8xf32> to vector<8x1xf32>
    %65 = vector.broadcast %64 : vector<8x1xf32> to vector<8x8xf32>
    %66 = arith.subf %62, %65 : vector<8x8xf32>
    %67 = math.exp %66 : vector<8x8xf32>
    %cst_20 = arith.constant dense<0.000000e+00> : vector<8xf32>
    %68 = vector.multi_reduction <add>, %67, %cst_20 [1] : vector<8x8xf32> to vector<8xf32>
    %69 = vector.shape_cast %68 : vector<8xf32> to vector<8x1xf32>
    %70 = tpu.reciprocal %69 : vector<8x1xf32> -> vector<8x1xf32>
    %71 = vector.broadcast %70 : vector<8x1xf32> to vector<8x8xf32>
    %72 = arith.mulf %67, %71 : vector<8x8xf32>
    %cst_21 = arith.constant dense<0.000000e+00> : vector<8x4xf32>
    %73 = tpu.matmul %72, %61, %cst_21 {dimension_numbers = #tpu.dot_dimension_numbers<[1], [0], [0], [1], [0, 0, 1, 1], [], []>} : vector<8x8xf32>, vector<8x4xf32>, vector<8x4xf32> -> vector<8x4xf32>
    %74 = vector.extract_strided_slice %11 {offsets = [0, 16], sizes = [8, 4], strides = [1, 1]} : vector<8x32xf32> to vector<8x4xf32>
    %75 = vector.extract_strided_slice %12 {offsets = [0, 16], sizes = [8, 4], strides = [1, 1]} : vector<8x32xf32> to vector<8x4xf32>
    %76 = vector.extract_strided_slice %13 {offsets = [0, 16], sizes = [8, 4], strides = [1, 1]} : vector<8x32xf32> to vector<8x4xf32>
    %cst_22 = arith.constant dense<0.000000e+00> : vector<8x8xf32>
    %77 = tpu.matmul %74, %75, %cst_22 {dimension_numbers = #tpu.dot_dimension_numbers<[1], [1], [0], [0], [0, 0, 1, 0], [], []>} : vector<8x4xf32>, vector<8x4xf32>, vector<8x8xf32> -> vector<8x8xf32>
    %cst_23 = arith.constant dense<0xFF800000> : vector<8xf32>
    %78 = vector.multi_reduction <maximumf>, %77, %cst_23 [1] : vector<8x8xf32> to vector<8xf32>
    %79 = vector.shape_cast %78 : vector<8xf32> to vector<8x1xf32>
    %80 = vector.broadcast %79 : vector<8x1xf32> to vector<8x8xf32>
    %81 = arith.subf %77, %80 : vector<8x8xf32>
    %82 = math.exp %81 : vector<8x8xf32>
    %cst_24 = arith.constant dense<0.000000e+00> : vector<8xf32>
    %83 = vector.multi_reduction <add>, %82, %cst_24 [1] : vector<8x8xf32> to vector<8xf32>
    %84 = vector.shape_cast %83 : vector<8xf32> to vector<8x1xf32>
    %85 = tpu.reciprocal %84 : vector<8x1xf32> -> vector<8x1xf32>
    %86 = vector.broadcast %85 : vector<8x1xf32> to vector<8x8xf32>
    %87 = arith.mulf %82, %86 : vector<8x8xf32>
    %cst_25 = arith.constant dense<0.000000e+00> : vector<8x4xf32>
    %88 = tpu.matmul %87, %76, %cst_25 {dimension_numbers = #tpu.dot_dimension_numbers<[1], [0], [0], [1], [0, 0, 1, 1], [], []>} : vector<8x8xf32>, vector<8x4xf32>, vector<8x4xf32> -> vector<8x4xf32>
    %89 = vector.extract_strided_slice %11 {offsets = [0, 20], sizes = [8, 4], strides = [1, 1]} : vector<8x32xf32> to vector<8x4xf32>
    %90 = vector.extract_strided_slice %12 {offsets = [0, 20], sizes = [8, 4], strides = [1, 1]} : vector<8x32xf32> to vector<8x4xf32>
    %91 = vector.extract_strided_slice %13 {offsets = [0, 20], sizes = [8, 4], strides = [1, 1]} : vector<8x32xf32> to vector<8x4xf32>
    %cst_26 = arith.constant dense<0.000000e+00> : vector<8x8xf32>
    %92 = tpu.matmul %89, %90, %cst_26 {dimension_numbers = #tpu.dot_dimension_numbers<[1], [1], [0], [0], [0, 0, 1, 0], [], []>} : vector<8x4xf32>, vector<8x4xf32>, vector<8x8xf32> -> vector<8x8xf32>
    %cst_27 = arith.constant dense<0xFF800000> : vector<8xf32>
    %93 = vector.multi_reduction <maximumf>, %92, %cst_27 [1] : vector<8x8xf32> to vector<8xf32>
    %94 = vector.shape_cast %93 : vector<8xf32> to vector<8x1xf32>
    %95 = vector.broadcast %94 : vector<8x1xf32> to vector<8x8xf32>
    %96 = arith.subf %92, %95 : vector<8x8xf32>
    %97 = math.exp %96 : vector<8x8xf32>
    %cst_28 = arith.constant dense<0.000000e+00> : vector<8xf32>
    %98 = vector.multi_reduction <add>, %97, %cst_28 [1] : vector<8x8xf32> to vector<8xf32>
    %99 = vector.shape_cast %98 : vector<8xf32> to vector<8x1xf32>
    %100 = tpu.reciprocal %99 : vector<8x1xf32> -> vector<8x1xf32>
    %101 = vector.broadcast %100 : vector<8x1xf32> to vector<8x8xf32>
    %102 = arith.mulf %97, %101 : vector<8x8xf32>
    %cst_29 = arith.constant dense<0.000000e+00> : vector<8x4xf32>
    %103 = tpu.matmul %102, %91, %cst_29 {dimension_numbers = #tpu.dot_dimension_numbers<[1], [0], [0], [1], [0, 0, 1, 1], [], []>} : vector<8x8xf32>, vector<8x4xf32>, vector<8x4xf32> -> vector<8x4xf32>
    %104 = vector.extract_strided_slice %11 {offsets = [0, 24], sizes = [8, 4], strides = [1, 1]} : vector<8x32xf32> to vector<8x4xf32>
    %105 = vector.extract_strided_slice %12 {offsets = [0, 24], sizes = [8, 4], strides = [1, 1]} : vector<8x32xf32> to vector<8x4xf32>
    %106 = vector.extract_strided_slice %13 {offsets = [0, 24], sizes = [8, 4], strides = [1, 1]} : vector<8x32xf32> to vector<8x4xf32>
    %cst_30 = arith.constant dense<0.000000e+00> : vector<8x8xf32>
    %107 = tpu.matmul %104, %105, %cst_30 {dimension_numbers = #tpu.dot_dimension_numbers<[1], [1], [0], [0], [0, 0, 1, 0], [], []>} : vector<8x4xf32>, vector<8x4xf32>, vector<8x8xf32> -> vector<8x8xf32>
    %cst_31 = arith.constant dense<0xFF800000> : vector<8xf32>
    %108 = vector.multi_reduction <maximumf>, %107, %cst_31 [1] : vector<8x8xf32> to vector<8xf32>
    %109 = vector.shape_cast %108 : vector<8xf32> to vector<8x1xf32>
    %110 = vector.broadcast %109 : vector<8x1xf32> to vector<8x8xf32>
    %111 = arith.subf %107, %110 : vector<8x8xf32>
    %112 = math.exp %111 : vector<8x8xf32>
    %cst_32 = arith.constant dense<0.000000e+00> : vector<8xf32>
    %113 = vector.multi_reduction <add>, %112, %cst_32 [1] : vector<8x8xf32> to vector<8xf32>
    %114 = vector.shape_cast %113 : vector<8xf32> to vector<8x1xf32>
    %115 = tpu.reciprocal %114 : vector<8x1xf32> -> vector<8x1xf32>
    %116 = vector.broadcast %115 : vector<8x1xf32> to vector<8x8xf32>
    %117 = arith.mulf %112, %116 : vector<8x8xf32>
    %cst_33 = arith.constant dense<0.000000e+00> : vector<8x4xf32>
    %118 = tpu.matmul %117, %106, %cst_33 {dimension_numbers = #tpu.dot_dimension_numbers<[1], [0], [0], [1], [0, 0, 1, 1], [], []>} : vector<8x8xf32>, vector<8x4xf32>, vector<8x4xf32> -> vector<8x4xf32>
    %119 = vector.extract_strided_slice %11 {offsets = [0, 28], sizes = [8, 4], strides = [1, 1]} : vector<8x32xf32> to vector<8x4xf32>
    %120 = vector.extract_strided_slice %12 {offsets = [0, 28], sizes = [8, 4], strides = [1, 1]} : vector<8x32xf32> to vector<8x4xf32>
    %121 = vector.extract_strided_slice %13 {offsets = [0, 28], sizes = [8, 4], strides = [1, 1]} : vector<8x32xf32> to vector<8x4xf32>
    %cst_34 = arith.constant dense<0.000000e+00> : vector<8x8xf32>
    %122 = tpu.matmul %119, %120, %cst_34 {dimension_numbers = #tpu.dot_dimension_numbers<[1], [1], [0], [0], [0, 0, 1, 0], [], []>} : vector<8x4xf32>, vector<8x4xf32>, vector<8x8xf32> -> vector<8x8xf32>
    %cst_35 = arith.constant dense<0xFF800000> : vector<8xf32>
    %123 = vector.multi_reduction <maximumf>, %122, %cst_35 [1] : vector<8x8xf32> to vector<8xf32>
    %124 = vector.shape_cast %123 : vector<8xf32> to vector<8x1xf32>
    %125 = vector.broadcast %124 : vector<8x1xf32> to vector<8x8xf32>
    %126 = arith.subf %122, %125 : vector<8x8xf32>
    %127 = math.exp %126 : vector<8x8xf32>
    %cst_36 = arith.constant dense<0.000000e+00> : vector<8xf32>
    %128 = vector.multi_reduction <add>, %127, %cst_36 [1] : vector<8x8xf32> to vector<8xf32>
    %129 = vector.shape_cast %128 : vector<8xf32> to vector<8x1xf32>
    %130 = tpu.reciprocal %129 : vector<8x1xf32> -> vector<8x1xf32>
    %131 = vector.broadcast %130 : vector<8x1xf32> to vector<8x8xf32>
    %132 = arith.mulf %127, %131 : vector<8x8xf32>
    %cst_37 = arith.constant dense<0.000000e+00> : vector<8x4xf32>
    %133 = tpu.matmul %132, %121, %cst_37 {dimension_numbers = #tpu.dot_dimension_numbers<[1], [0], [0], [1], [0, 0, 1, 1], [], []>} : vector<8x8xf32>, vector<8x4xf32>, vector<8x4xf32> -> vector<8x4xf32>
    %134 = tpu.concatenate %28, %43, %58, %73, %88, %103, %118, %133 in 1 : vector<8x4xf32>, vector<8x4xf32>, vector<8x4xf32>, vector<8x4xf32>, vector<8x4xf32>, vector<8x4xf32>, vector<8x4xf32>, vector<8x4xf32> -> vector<8x32xf32>
    %135 = vector.extract_strided_slice %8 {offsets = [8, 0], sizes = [8, 32], strides = [1, 1]} : vector<16x32xf32> to vector<8x32xf32>
    %136 = vector.extract_strided_slice %9 {offsets = [8, 0], sizes = [8, 32], strides = [1, 1]} : vector<16x32xf32> to vector<8x32xf32>
    %137 = vector.extract_strided_slice %10 {offsets = [8, 0], sizes = [8, 32], strides = [1, 1]} : vector<16x32xf32> to vector<8x32xf32>
    %138 = vector.extract_strided_slice %135 {offsets = [0, 0], sizes = [8, 4], strides = [1, 1]} : vector<8x32xf32> to vector<8x4xf32>
    %139 = vector.extract_strided_slice %136 {offsets = [0, 0], sizes = [8, 4], strides = [1, 1]} : vector<8x32xf32> to vector<8x4xf32>
    %140 = vector.extract_strided_slice %137 {offsets = [0, 0], sizes = [8, 4], strides = [1, 1]} : vector<8x32xf32> to vector<8x4xf32>
    %cst_38 = arith.constant dense<0.000000e+00> : vector<8x8xf32>
    %141 = tpu.matmul %138, %139, %cst_38 {dimension_numbers = #tpu.dot_dimension_numbers<[1], [1], [0], [0], [0, 0, 1, 0], [], []>} : vector<8x4xf32>, vector<8x4xf32>, vector<8x8xf32> -> vector<8x8xf32>
    %cst_39 = arith.constant dense<0xFF800000> : vector<8xf32>
    %142 = vector.multi_reduction <maximumf>, %141, %cst_39 [1] : vector<8x8xf32> to vector<8xf32>
    %143 = vector.shape_cast %142 : vector<8xf32> to vector<8x1xf32>
    %144 = vector.broadcast %143 : vector<8x1xf32> to vector<8x8xf32>
    %145 = arith.subf %141, %144 : vector<8x8xf32>
    %146 = math.exp %145 : vector<8x8xf32>
    %cst_40 = arith.constant dense<0.000000e+00> : vector<8xf32>
    %147 = vector.multi_reduction <add>, %146, %cst_40 [1] : vector<8x8xf32> to vector<8xf32>
    %148 = vector.shape_cast %147 : vector<8xf32> to vector<8x1xf32>
    %149 = tpu.reciprocal %148 : vector<8x1xf32> -> vector<8x1xf32>
    %150 = vector.broadcast %149 : vector<8x1xf32> to vector<8x8xf32>
    %151 = arith.mulf %146, %150 : vector<8x8xf32>
    %cst_41 = arith.constant dense<0.000000e+00> : vector<8x4xf32>
    %152 = tpu.matmul %151, %140, %cst_41 {dimension_numbers = #tpu.dot_dimension_numbers<[1], [0], [0], [1], [0, 0, 1, 1], [], []>} : vector<8x8xf32>, vector<8x4xf32>, vector<8x4xf32> -> vector<8x4xf32>
    %153 = vector.extract_strided_slice %135 {offsets = [0, 4], sizes = [8, 4], strides = [1, 1]} : vector<8x32xf32> to vector<8x4xf32>
    %154 = vector.extract_strided_slice %136 {offsets = [0, 4], sizes = [8, 4], strides = [1, 1]} : vector<8x32xf32> to vector<8x4xf32>
    %155 = vector.extract_strided_slice %137 {offsets = [0, 4], sizes = [8, 4], strides = [1, 1]} : vector<8x32xf32> to vector<8x4xf32>
    %cst_42 = arith.constant dense<0.000000e+00> : vector<8x8xf32>
    %156 = tpu.matmul %153, %154, %cst_42 {dimension_numbers = #tpu.dot_dimension_numbers<[1], [1], [0], [0], [0, 0, 1, 0], [], []>} : vector<8x4xf32>, vector<8x4xf32>, vector<8x8xf32> -> vector<8x8xf32>
    %cst_43 = arith.constant dense<0xFF800000> : vector<8xf32>
    %157 = vector.multi_reduction <maximumf>, %156, %cst_43 [1] : vector<8x8xf32> to vector<8xf32>
    %158 = vector.shape_cast %157 : vector<8xf32> to vector<8x1xf32>
    %159 = vector.broadcast %158 : vector<8x1xf32> to vector<8x8xf32>
    %160 = arith.subf %156, %159 : vector<8x8xf32>
    %161 = math.exp %160 : vector<8x8xf32>
    %cst_44 = arith.constant dense<0.000000e+00> : vector<8xf32>
    %162 = vector.multi_reduction <add>, %161, %cst_44 [1] : vector<8x8xf32> to vector<8xf32>
    %163 = vector.shape_cast %162 : vector<8xf32> to vector<8x1xf32>
    %164 = tpu.reciprocal %163 : vector<8x1xf32> -> vector<8x1xf32>
    %165 = vector.broadcast %164 : vector<8x1xf32> to vector<8x8xf32>
    %166 = arith.mulf %161, %165 : vector<8x8xf32>
    %cst_45 = arith.constant dense<0.000000e+00> : vector<8x4xf32>
    %167 = tpu.matmul %166, %155, %cst_45 {dimension_numbers = #tpu.dot_dimension_numbers<[1], [0], [0], [1], [0, 0, 1, 1], [], []>} : vector<8x8xf32>, vector<8x4xf32>, vector<8x4xf32> -> vector<8x4xf32>
    %168 = vector.extract_strided_slice %135 {offsets = [0, 8], sizes = [8, 4], strides = [1, 1]} : vector<8x32xf32> to vector<8x4xf32>
    %169 = vector.extract_strided_slice %136 {offsets = [0, 8], sizes = [8, 4], strides = [1, 1]} : vector<8x32xf32> to vector<8x4xf32>
    %170 = vector.extract_strided_slice %137 {offsets = [0, 8], sizes = [8, 4], strides = [1, 1]} : vector<8x32xf32> to vector<8x4xf32>
    %cst_46 = arith.constant dense<0.000000e+00> : vector<8x8xf32>
    %171 = tpu.matmul %168, %169, %cst_46 {dimension_numbers = #tpu.dot_dimension_numbers<[1], [1], [0], [0], [0, 0, 1, 0], [], []>} : vector<8x4xf32>, vector<8x4xf32>, vector<8x8xf32> -> vector<8x8xf32>
    %cst_47 = arith.constant dense<0xFF800000> : vector<8xf32>
    %172 = vector.multi_reduction <maximumf>, %171, %cst_47 [1] : vector<8x8xf32> to vector<8xf32>
    %173 = vector.shape_cast %172 : vector<8xf32> to vector<8x1xf32>
    %174 = vector.broadcast %173 : vector<8x1xf32> to vector<8x8xf32>
    %175 = arith.subf %171, %174 : vector<8x8xf32>
    %176 = math.exp %175 : vector<8x8xf32>
    %cst_48 = arith.constant dense<0.000000e+00> : vector<8xf32>
    %177 = vector.multi_reduction <add>, %176, %cst_48 [1] : vector<8x8xf32> to vector<8xf32>
    %178 = vector.shape_cast %177 : vector<8xf32> to vector<8x1xf32>
    %179 = tpu.reciprocal %178 : vector<8x1xf32> -> vector<8x1xf32>
    %180 = vector.broadcast %179 : vector<8x1xf32> to vector<8x8xf32>
    %181 = arith.mulf %176, %180 : vector<8x8xf32>
    %cst_49 = arith.constant dense<0.000000e+00> : vector<8x4xf32>
    %182 = tpu.matmul %181, %170, %cst_49 {dimension_numbers = #tpu.dot_dimension_numbers<[1], [0], [0], [1], [0, 0, 1, 1], [], []>} : vector<8x8xf32>, vector<8x4xf32>, vector<8x4xf32> -> vector<8x4xf32>
    %183 = vector.extract_strided_slice %135 {offsets = [0, 12], sizes = [8, 4], strides = [1, 1]} : vector<8x32xf32> to vector<8x4xf32>
    %184 = vector.extract_strided_slice %136 {offsets = [0, 12], sizes = [8, 4], strides = [1, 1]} : vector<8x32xf32> to vector<8x4xf32>
    %185 = vector.extract_strided_slice %137 {offsets = [0, 12], sizes = [8, 4], strides = [1, 1]} : vector<8x32xf32> to vector<8x4xf32>
    %cst_50 = arith.constant dense<0.000000e+00> : vector<8x8xf32>
    %186 = tpu.matmul %183, %184, %cst_50 {dimension_numbers = #tpu.dot_dimension_numbers<[1], [1], [0], [0], [0, 0, 1, 0], [], []>} : vector<8x4xf32>, vector<8x4xf32>, vector<8x8xf32> -> vector<8x8xf32>
    %cst_51 = arith.constant dense<0xFF800000> : vector<8xf32>
    %187 = vector.multi_reduction <maximumf>, %186, %cst_51 [1] : vector<8x8xf32> to vector<8xf32>
    %188 = vector.shape_cast %187 : vector<8xf32> to vector<8x1xf32>
    %189 = vector.broadcast %188 : vector<8x1xf32> to vector<8x8xf32>
    %190 = arith.subf %186, %189 : vector<8x8xf32>
    %191 = math.exp %190 : vector<8x8xf32>
    %cst_52 = arith.constant dense<0.000000e+00> : vector<8xf32>
    %192 = vector.multi_reduction <add>, %191, %cst_52 [1] : vector<8x8xf32> to vector<8xf32>
    %193 = vector.shape_cast %192 : vector<8xf32> to vector<8x1xf32>
    %194 = tpu.reciprocal %193 : vector<8x1xf32> -> vector<8x1xf32>
    %195 = vector.broadcast %194 : vector<8x1xf32> to vector<8x8xf32>
    %196 = arith.mulf %191, %195 : vector<8x8xf32>
    %cst_53 = arith.constant dense<0.000000e+00> : vector<8x4xf32>
    %197 = tpu.matmul %196, %185, %cst_53 {dimension_numbers = #tpu.dot_dimension_numbers<[1], [0], [0], [1], [0, 0, 1, 1], [], []>} : vector<8x8xf32>, vector<8x4xf32>, vector<8x4xf32> -> vector<8x4xf32>
    %198 = vector.extract_strided_slice %135 {offsets = [0, 16], sizes = [8, 4], strides = [1, 1]} : vector<8x32xf32> to vector<8x4xf32>
    %199 = vector.extract_strided_slice %136 {offsets = [0, 16], sizes = [8, 4], strides = [1, 1]} : vector<8x32xf32> to vector<8x4xf32>
    %200 = vector.extract_strided_slice %137 {offsets = [0, 16], sizes = [8, 4], strides = [1, 1]} : vector<8x32xf32> to vector<8x4xf32>
    %cst_54 = arith.constant dense<0.000000e+00> : vector<8x8xf32>
    %201 = tpu.matmul %198, %199, %cst_54 {dimension_numbers = #tpu.dot_dimension_numbers<[1], [1], [0], [0], [0, 0, 1, 0], [], []>} : vector<8x4xf32>, vector<8x4xf32>, vector<8x8xf32> -> vector<8x8xf32>
    %cst_55 = arith.constant dense<0xFF800000> : vector<8xf32>
    %202 = vector.multi_reduction <maximumf>, %201, %cst_55 [1] : vector<8x8xf32> to vector<8xf32>
    %203 = vector.shape_cast %202 : vector<8xf32> to vector<8x1xf32>
    %204 = vector.broadcast %203 : vector<8x1xf32> to vector<8x8xf32>
    %205 = arith.subf %201, %204 : vector<8x8xf32>
    %206 = math.exp %205 : vector<8x8xf32>
    %cst_56 = arith.constant dense<0.000000e+00> : vector<8xf32>
    %207 = vector.multi_reduction <add>, %206, %cst_56 [1] : vector<8x8xf32> to vector<8xf32>
    %208 = vector.shape_cast %207 : vector<8xf32> to vector<8x1xf32>
    %209 = tpu.reciprocal %208 : vector<8x1xf32> -> vector<8x1xf32>
    %210 = vector.broadcast %209 : vector<8x1xf32> to vector<8x8xf32>
    %211 = arith.mulf %206, %210 : vector<8x8xf32>
    %cst_57 = arith.constant dense<0.000000e+00> : vector<8x4xf32>
    %212 = tpu.matmul %211, %200, %cst_57 {dimension_numbers = #tpu.dot_dimension_numbers<[1], [0], [0], [1], [0, 0, 1, 1], [], []>} : vector<8x8xf32>, vector<8x4xf32>, vector<8x4xf32> -> vector<8x4xf32>
    %213 = vector.extract_strided_slice %135 {offsets = [0, 20], sizes = [8, 4], strides = [1, 1]} : vector<8x32xf32> to vector<8x4xf32>
    %214 = vector.extract_strided_slice %136 {offsets = [0, 20], sizes = [8, 4], strides = [1, 1]} : vector<8x32xf32> to vector<8x4xf32>
    %215 = vector.extract_strided_slice %137 {offsets = [0, 20], sizes = [8, 4], strides = [1, 1]} : vector<8x32xf32> to vector<8x4xf32>
    %cst_58 = arith.constant dense<0.000000e+00> : vector<8x8xf32>
    %216 = tpu.matmul %213, %214, %cst_58 {dimension_numbers = #tpu.dot_dimension_numbers<[1], [1], [0], [0], [0, 0, 1, 0], [], []>} : vector<8x4xf32>, vector<8x4xf32>, vector<8x8xf32> -> vector<8x8xf32>
    %cst_59 = arith.constant dense<0xFF800000> : vector<8xf32>
    %217 = vector.multi_reduction <maximumf>, %216, %cst_59 [1] : vector<8x8xf32> to vector<8xf32>
    %218 = vector.shape_cast %217 : vector<8xf32> to vector<8x1xf32>
    %219 = vector.broadcast %218 : vector<8x1xf32> to vector<8x8xf32>
    %220 = arith.subf %216, %219 : vector<8x8xf32>
    %221 = math.exp %220 : vector<8x8xf32>
    %cst_60 = arith.constant dense<0.000000e+00> : vector<8xf32>
    %222 = vector.multi_reduction <add>, %221, %cst_60 [1] : vector<8x8xf32> to vector<8xf32>
    %223 = vector.shape_cast %222 : vector<8xf32> to vector<8x1xf32>
    %224 = tpu.reciprocal %223 : vector<8x1xf32> -> vector<8x1xf32>
    %225 = vector.broadcast %224 : vector<8x1xf32> to vector<8x8xf32>
    %226 = arith.mulf %221, %225 : vector<8x8xf32>
    %cst_61 = arith.constant dense<0.000000e+00> : vector<8x4xf32>
    %227 = tpu.matmul %226, %215, %cst_61 {dimension_numbers = #tpu.dot_dimension_numbers<[1], [0], [0], [1], [0, 0, 1, 1], [], []>} : vector<8x8xf32>, vector<8x4xf32>, vector<8x4xf32> -> vector<8x4xf32>
    %228 = vector.extract_strided_slice %135 {offsets = [0, 24], sizes = [8, 4], strides = [1, 1]} : vector<8x32xf32> to vector<8x4xf32>
    %229 = vector.extract_strided_slice %136 {offsets = [0, 24], sizes = [8, 4], strides = [1, 1]} : vector<8x32xf32> to vector<8x4xf32>
    %230 = vector.extract_strided_slice %137 {offsets = [0, 24], sizes = [8, 4], strides = [1, 1]} : vector<8x32xf32> to vector<8x4xf32>
    %cst_62 = arith.constant dense<0.000000e+00> : vector<8x8xf32>
    %231 = tpu.matmul %228, %229, %cst_62 {dimension_numbers = #tpu.dot_dimension_numbers<[1], [1], [0], [0], [0, 0, 1, 0], [], []>} : vector<8x4xf32>, vector<8x4xf32>, vector<8x8xf32> -> vector<8x8xf32>
    %cst_63 = arith.constant dense<0xFF800000> : vector<8xf32>
    %232 = vector.multi_reduction <maximumf>, %231, %cst_63 [1] : vector<8x8xf32> to vector<8xf32>
    %233 = vector.shape_cast %232 : vector<8xf32> to vector<8x1xf32>
    %234 = vector.broadcast %233 : vector<8x1xf32> to vector<8x8xf32>
    %235 = arith.subf %231, %234 : vector<8x8xf32>
    %236 = math.exp %235 : vector<8x8xf32>
    %cst_64 = arith.constant dense<0.000000e+00> : vector<8xf32>
    %237 = vector.multi_reduction <add>, %236, %cst_64 [1] : vector<8x8xf32> to vector<8xf32>
    %238 = vector.shape_cast %237 : vector<8xf32> to vector<8x1xf32>
    %239 = tpu.reciprocal %238 : vector<8x1xf32> -> vector<8x1xf32>
    %240 = vector.broadcast %239 : vector<8x1xf32> to vector<8x8xf32>
    %241 = arith.mulf %236, %240 : vector<8x8xf32>
    %cst_65 = arith.constant dense<0.000000e+00> : vector<8x4xf32>
    %242 = tpu.matmul %241, %230, %cst_65 {dimension_numbers = #tpu.dot_dimension_numbers<[1], [0], [0], [1], [0, 0, 1, 1], [], []>} : vector<8x8xf32>, vector<8x4xf32>, vector<8x4xf32> -> vector<8x4xf32>
    %243 = vector.extract_strided_slice %135 {offsets = [0, 28], sizes = [8, 4], strides = [1, 1]} : vector<8x32xf32> to vector<8x4xf32>
    %244 = vector.extract_strided_slice %136 {offsets = [0, 28], sizes = [8, 4], strides = [1, 1]} : vector<8x32xf32> to vector<8x4xf32>
    %245 = vector.extract_strided_slice %137 {offsets = [0, 28], sizes = [8, 4], strides = [1, 1]} : vector<8x32xf32> to vector<8x4xf32>
    %cst_66 = arith.constant dense<0.000000e+00> : vector<8x8xf32>
    %246 = tpu.matmul %243, %244, %cst_66 {dimension_numbers = #tpu.dot_dimension_numbers<[1], [1], [0], [0], [0, 0, 1, 0], [], []>} : vector<8x4xf32>, vector<8x4xf32>, vector<8x8xf32> -> vector<8x8xf32>
    %cst_67 = arith.constant dense<0xFF800000> : vector<8xf32>
    %247 = vector.multi_reduction <maximumf>, %246, %cst_67 [1] : vector<8x8xf32> to vector<8xf32>
    %248 = vector.shape_cast %247 : vector<8xf32> to vector<8x1xf32>
    %249 = vector.broadcast %248 : vector<8x1xf32> to vector<8x8xf32>
    %250 = arith.subf %246, %249 : vector<8x8xf32>
    %251 = math.exp %250 : vector<8x8xf32>
    %cst_68 = arith.constant dense<0.000000e+00> : vector<8xf32>
    %252 = vector.multi_reduction <add>, %251, %cst_68 [1] : vector<8x8xf32> to vector<8xf32>
    %253 = vector.shape_cast %252 : vector<8xf32> to vector<8x1xf32>
    %254 = tpu.reciprocal %253 : vector<8x1xf32> -> vector<8x1xf32>
    %255 = vector.broadcast %254 : vector<8x1xf32> to vector<8x8xf32>
    %256 = arith.mulf %251, %255 : vector<8x8xf32>
    %cst_69 = arith.constant dense<0.000000e+00> : vector<8x4xf32>
    %257 = tpu.matmul %256, %245, %cst_69 {dimension_numbers = #tpu.dot_dimension_numbers<[1], [0], [0], [1], [0, 0, 1, 1], [], []>} : vector<8x8xf32>, vector<8x4xf32>, vector<8x4xf32> -> vector<8x4xf32>
    %258 = tpu.concatenate %152, %167, %182, %197, %212, %227, %242, %257 in 1 : vector<8x4xf32>, vector<8x4xf32>, vector<8x4xf32>, vector<8x4xf32>, vector<8x4xf32>, vector<8x4xf32>, vector<8x4xf32>, vector<8x4xf32> -> vector<8x32xf32>
    %259 = tpu.concatenate %134, %258 in 0 : vector<8x32xf32>, vector<8x32xf32> -> vector<16x32xf32>
    %c0_70 = arith.constant 0 : index
    %c0_71 = arith.constant 0 : index
    %260 = vector.load %arg4[%c0_70, %c0_71] : memref<32x32xf32, #tpu.memory_space<vmem>>, vector<32x32xf32>
    %cst_72 = arith.constant dense<0.000000e+00> : vector<16x32xf32>
    %261 = tpu.matmul %259, %260, %cst_72 {dimension_numbers = #tpu.dot_dimension_numbers<[1], [0], [0], [1], [0, 0, 1, 1], [], []>} : vector<16x32xf32>, vector<32x32xf32>, vector<16x32xf32> -> vector<16x32xf32>
    %c0_73 = arith.constant 0 : index
    %c0_74 = arith.constant 0 : index
    %262 = vector.load %arg5[%c0_73, %c0_74] : memref<1x32xf32, #tpu.memory_space<vmem>>, vector<1x32xf32>
    %263 = vector.broadcast %262 : vector<1x32xf32> to vector<16x32xf32>
    %264 = arith.addf %261, %263 : vector<16x32xf32>
    %265 = arith.addf %264, %0 : vector<16x32xf32>
    %c0_75 = arith.constant 0 : index
    %c0_76 = arith.constant 0 : index
    %266 = vector.load %arg6[%c0_75, %c0_76] : memref<32x256xf32, #tpu.memory_space<vmem>>, vector<32x256xf32>
    %cst_77 = arith.constant dense<0.000000e+00> : vector<16x256xf32>
    %267 = tpu.matmul %265, %266, %cst_77 {dimension_numbers = #tpu.dot_dimension_numbers<[1], [0], [0], [1], [0, 0, 1, 1], [], []>} : vector<16x32xf32>, vector<32x256xf32>, vector<16x256xf32> -> vector<16x256xf32>
    %c0_78 = arith.constant 0 : index
    %c0_79 = arith.constant 0 : index
    %268 = vector.load %arg7[%c0_78, %c0_79] : memref<1x256xf32, #tpu.memory_space<vmem>>, vector<1x256xf32>
    %269 = vector.broadcast %268 : vector<1x256xf32> to vector<16x256xf32>
    %270 = arith.addf %267, %269 : vector<16x256xf32>
    %cst_80 = arith.constant 0.000000e+00 : f32
    %271 = vector.broadcast %cst_80 : f32 to vector<16x256xf32>
    %272 = arith.cmpf ogt, %270, %271 : vector<16x256xf32>
    %cst_81 = arith.constant 2.000000e-01 : f32
    %273 = vector.broadcast %cst_81 : f32 to vector<16x256xf32>
    %274 = arith.mulf %273, %270 : vector<16x256xf32>
    %275 = arith.select %272, %270, %274 : vector<16x256xi1>, vector<16x256xf32>
    %c0_82 = arith.constant 0 : index
    %c0_83 = arith.constant 0 : index
    %276 = vector.load %arg8[%c0_82, %c0_83] : memref<256x32xf32, #tpu.memory_space<vmem>>, vector<256x32xf32>
    %cst_84 = arith.constant dense<0.000000e+00> : vector<16x32xf32>
    %277 = tpu.matmul %275, %276, %cst_84 {dimension_numbers = #tpu.dot_dimension_numbers<[1], [0], [0], [1], [0, 0, 1, 1], [], []>} : vector<16x256xf32>, vector<256x32xf32>, vector<16x32xf32> -> vector<16x32xf32>
    %c0_85 = arith.constant 0 : index
    %c0_86 = arith.constant 0 : index
    %278 = vector.load %arg9[%c0_85, %c0_86] : memref<1x32xf32, #tpu.memory_space<vmem>>, vector<1x32xf32>
    %279 = vector.broadcast %278 : vector<1x32xf32> to vector<16x32xf32>
    %280 = arith.addf %277, %279 : vector<16x32xf32>
    %cst_87 = arith.constant 0.000000e+00 : f32
    %281 = vector.broadcast %cst_87 : f32 to vector<16x32xf32>
    %282 = arith.cmpf ogt, %280, %281 : vector<16x32xf32>
    %cst_88 = arith.constant 2.000000e-01 : f32
    %283 = vector.broadcast %cst_88 : f32 to vector<16x32xf32>
    %284 = arith.mulf %283, %280 : vector<16x32xf32>
    %285 = arith.select %282, %280, %284 : vector<16x32xi1>, vector<16x32xf32>
    %286 = arith.addf %265, %285 : vector<16x32xf32>
    %c0_89 = arith.constant 0 : index
    %c0_90 = arith.constant 0 : index
    %287 = vector.load %arg10[%c0_89, %c0_90] : memref<16x32xf32, #tpu.memory_space<vmem>>, vector<16x32xf32>
    tpu.vector_store %arg10[%c0_89, %c0_90], %286 {strides = array<i32>} : memref<16x32xf32, #tpu.memory_space<vmem>>, vector<16x32xf32>,
    return
  }
  func.func @transform_0(%arg0: i32) -> (i32, i32) {
    %c0_i32 = arith.constant 0 : i32
    %c0_i32_0 = arith.constant 0 : i32
    return %arg0, %c0_i32 : i32, i32
  }
  func.func @transform_1(%arg0: i32) -> (i32, i32) {
    %c0_i32 = arith.constant 0 : i32
    %c0_i32_0 = arith.constant 0 : i32
    %c0_i32_1 = arith.constant 0 : i32
    return %c0_i32, %c0_i32_0 : i32, i32
  }
  func.func @transform_2(%arg0: i32) -> (i32, i32) {
    %c0_i32 = arith.constant 0 : i32
    %c0_i32_0 = arith.constant 0 : i32
    %c0_i32_1 = arith.constant 0 : i32
    return %c0_i32, %c0_i32_0 : i32, i32
  }
  func.func @transform_3(%arg0: i32) -> (i32, i32) {
    %c0_i32 = arith.constant 0 : i32
    %c0_i32_0 = arith.constant 0 : i32
    %c0_i32_1 = arith.constant 0 : i32
    return %c0_i32, %c0_i32_0 : i32, i32
  }
  func.func @transform_4(%arg0: i32) -> (i32, i32) {
    %c0_i32 = arith.constant 0 : i32
    %c0_i32_0 = arith.constant 0 : i32
    %c0_i32_1 = arith.constant 0 : i32
    return %c0_i32, %c0_i32_0 : i32, i32
  }
  func.func @transform_5(%arg0: i32) -> (i32, i32) {
    %c0_i32 = arith.constant 0 : i32
    %c0_i32_0 = arith.constant 0 : i32
    %c0_i32_1 = arith.constant 0 : i32
    return %c0_i32, %c0_i32_0 : i32, i32
  }
  func.func @transform_6(%arg0: i32) -> (i32, i32) {
    %c0_i32 = arith.constant 0 : i32
    %c0_i32_0 = arith.constant 0 : i32
    %c0_i32_1 = arith.constant 0 : i32
    return %c0_i32, %c0_i32_0 : i32, i32
  }
  func.func @transform_7(%arg0: i32) -> (i32, i32) {
    %c0_i32 = arith.constant 0 : i32
    %c0_i32_0 = arith.constant 0 : i32
    %c0_i32_1 = arith.constant 0 : i32
    return %c0_i32, %c0_i32_0 : i32, i32
  }
  func.func @transform_8(%arg0: i32) -> (i32, i32) {
    %c0_i32 = arith.constant 0 : i32
    %c0_i32_0 = arith.constant 0 : i32
    %c0_i32_1 = arith.constant 0 : i32
    return %c0_i32, %c0_i32_0 : i32, i32
  }
  func.func @transform_9(%arg0: i32) -> (i32, i32) {
    %c0_i32 = arith.constant 0 : i32
    %c0_i32_0 = arith.constant 0 : i32
    return %arg0, %c0_i32 : i32, i32
  }
}

</mosaic_0001>

<llo_original>
// kernel: tpu_custom_call.1
$region0: #{tpu_custom_call.1}
  #allocation0 [shape = 'u32[]', space=smem, size = 0x4, offset = 0x4, fixed_abs, tag = 'smem constant byte address 0x4 - core index']
  #allocation1 [shape = 'u32[72,128]{1,0:T(1,128)}', space=vmem, size = 0x9000, scoped, tag = 'internal scratch']
  %s0 = inlined_call_operand.vmem [shape: f32[16,32], index: 0, kind: input, shape index: {}]
  %s1 = inlined_call_operand.vmem [shape: f32[32,96], index: 1, kind: input, shape index: {}]
  %s2 = inlined_call_operand.vmem [shape: f32[1,96], index: 2, kind: input, shape index: {}]
  %s3 = inlined_call_operand.vmem [shape: f32[32,32], index: 3, kind: input, shape index: {}]
  %s4 = inlined_call_operand.vmem [shape: f32[1,32], index: 4, kind: input, shape index: {}]
  %s5 = inlined_call_operand.vmem [shape: f32[32,256], index: 5, kind: input, shape index: {}]
  %s6 = inlined_call_operand.vmem [shape: f32[1,256], index: 6, kind: input, shape index: {}]
  %s7 = inlined_call_operand.vmem [shape: f32[256,32], index: 7, kind: input, shape index: {}]
  %s8 = inlined_call_operand.vmem [shape: f32[1,32], index: 8, kind: input, shape index: {}]
  %s9 = inlined_call_operand.hbm [shape: f32[16,32], index: 9, kind: output, shape index: {}]
  %s10 = sld [smem:[#allocation0]]
  $region46: #{tpu_custom_call.1} parent=0
    _
  %s12 = ssub.s32 1, %s10
  %s13 = scalar_select 0, %s12, %s10
  $region1: #{tpu_custom_call.1} parent=0
    #allocation2 [shape = 'u8[8192]{0}', space=vmem, size = 0x2000, scoped, tag = 'output window, operand 0, single buffered']
    #allocation3 [shape = 's32[1]{0}', space=sflag, size = 0x4, scoped, tag = 'scoped memory for tpu_custom_call.1']
    %14 = vsyncpa [#allocation3], 0
    // Predicated region
    $region2: #{tpu_custom_call.1} parent=1 // pred_check
      _
    $region3: #{tpu_custom_call.1} parent=1 // pred_check_branch
      %16 = sbr.rel (0) target = $region5
    $region4: #{tpu_custom_call.1} parent=1 // pred_region
      _
    $region5: #{tpu_custom_call.1} parent=1 // pred_fallthru
      _
    // Predicated region
    $region6: #{tpu_custom_call.1} parent=1 // pred_check
      _
    $region7: #{tpu_custom_call.1} parent=1 // pred_check_branch
      %18 = sbr.rel (0) target = $region9
    $region8: #{tpu_custom_call.1} parent=1 // pred_region
      _
    $region9: #{tpu_custom_call.1} parent=1 // pred_fallthru
      _
    // Predicated region
    $region10: #{tpu_custom_call.1} parent=1 // pred_check
      _
    $region11: #{tpu_custom_call.1} parent=1 // pred_check_branch
      %20 = sbr.rel (0) target = $region13
    $region12: #{tpu_custom_call.1} parent=1 // pred_region
      _
    $region13: #{tpu_custom_call.1} parent=1 // pred_fallthru
      _
    // Predicated region
    $region14: #{tpu_custom_call.1} parent=1 // pred_check
      _
    $region15: #{tpu_custom_call.1} parent=1 // pred_check_branch
      %22 = sbr.rel (0) target = $region17
    $region16: #{tpu_custom_call.1} parent=1 // pred_region
      _
    $region17: #{tpu_custom_call.1} parent=1 // pred_fallthru
      _
    // Predicated region
    $region18: #{tpu_custom_call.1} parent=1 // pred_check
      _
    $region19: #{tpu_custom_call.1} parent=1 // pred_check_branch
      %24 = sbr.rel (0) target = $region21
    $region20: #{tpu_custom_call.1} parent=1 // pred_region
      _
    $region21: #{tpu_custom_call.1} parent=1 // pred_fallthru
      _
    // Predicated region
    $region22: #{tpu_custom_call.1} parent=1 // pred_check
      _
    $region23: #{tpu_custom_call.1} parent=1 // pred_check_branch
      %26 = sbr.rel (0) target = $region25
    $region24: #{tpu_custom_call.1} parent=1 // pred_region
      _
    $region25: #{tpu_custom_call.1} parent=1 // pred_fallthru
      _
    // Predicated region
    $region26: #{tpu_custom_call.1} parent=1 // pred_check
      _
    $region27: #{tpu_custom_call.1} parent=1 // pred_check_branch
      %28 = sbr.rel (0) target = $region29
    $region28: #{tpu_custom_call.1} parent=1 // pred_region
      _
    $region29: #{tpu_custom_call.1} parent=1 // pred_fallthru
      _
    // Predicated region
    $region30: #{tpu_custom_call.1} parent=1 // pred_check
      _
    $region31: #{tpu_custom_call.1} parent=1 // pred_check_branch
      %30 = sbr.rel (0) target = $region33
    $region32: #{tpu_custom_call.1} parent=1 // pred_region
      _
    $region33: #{tpu_custom_call.1} parent=1 // pred_fallthru
      _
    // Predicated region
    $region34: #{tpu_custom_call.1} parent=1 // pred_check
      _
    $region35: #{tpu_custom_call.1} parent=1 // pred_check_branch
      %32 = sbr.rel (0) target = $region37
    $region36: #{tpu_custom_call.1} parent=1 // pred_region
      _
    $region37: #{tpu_custom_call.1} parent=1 // pred_fallthru
      _
    %v33 = vld [vmem:[%s0] sm:$0xff]
    %v34 = vld [vmem:[%s0 + $0x8] sm:$0xff]
    %v35 = vld [vmem:[%s1] sm:$0xff]
    %v36 = vld [vmem:[%s1 + $0x8] sm:$0xff]
    %v37 = vld [vmem:[%s1 + $0x10] sm:$0xff]
    %v38 = vld [vmem:[%s1 + $0x18] sm:$0xff]
    %v39 = vld [vmem:[%s2] sm:$0x1]
    %v41 = vperm.slane %v39, 0
    %vm43 = vcmask 261120
    %v45 = vsel %vm43, %v33, 0
    %v48 = vsel %vm43, %v34, 0
    %50 = vmatpush.msra.mxu0 0.0
    %51 = vmatpush.msra.mxu0 0.0
    %52 = vmatpush.msra.mxu0 0.0
    %53 = vmatpush.msra.mxu0 0.0
    %54 = vmatpush.msra.mxu0 0.0
    %55 = vmatpush.msra.mxu0 0.0
    %56 = vmatpush.msra.mxu0 0.0
    %57 = vmatpush.msra.mxu0 0.0
    %58 = vmatpush.msra.mxu0 0.0
    %59 = vmatpush.msra.mxu0 0.0
    %60 = vmatpush.msra.mxu0 0.0
    %61 = vmatpush.msra.mxu0 0.0
    %62 = vmatpush.msra.mxu0 %v38
    %63 = vmatpush.msra.mxu0 %v37
    %64 = vmatpush.msra.mxu0 %v36
    %65 = vmatpush.msra.mxu0 %v35
    %66 = vmatmul.f32.gmra.mxu0 %v45
    %v67 = vpop.f32.mrf.mxu0
    %v68 = vadd.f32 %v41, %v67
    %69 = vmatmul.f32.gmra.mxu0 %v48
    %v70 = vpop.f32.mrf.mxu0
    %v71 = vadd.f32 %v41, %v70
    %72 = vdwg.mxu0
    %v73 = vmul.f32 %v68, 0.5
    %v74 = vmul.f32 %v71, 0.5
    %76 = vrot.lane.b32.xlu0 %v68, 96
    %v77 = vpop.permute.xlu0 %76
    %vm78 = vcmask 31744
    %v80 = vsel %vm78, %v73, 0
    %v82 = vsel %vm78, %v77, 0
    %84 = vmatpush.xpose.msra.mxu0 0.0
    %85 = vmatpush.xpose.msra.mxu0 0.0
    %86 = vmatpush.xpose.msra.mxu0 0.0
    %87 = vmatpush.xpose.msra.mxu0 0.0
    %88 = vmatpush.xpose.msra.mxu0 0.0
    %89 = vmatpush.xpose.msra.mxu0 0.0
    %90 = vmatpush.xpose.msra.mxu0 0.0
    %91 = vmatpush.xpose.msra.mxu0 0.0
    %92 = vmatpush.xpose.msra.mxu0 0.0
    %93 = vmatpush.xpose.msra.mxu0 0.0
    %94 = vmatpush.xpose.msra.mxu0 0.0
    %95 = vmatpush.xpose.msra.mxu0 0.0
    %96 = vmatpush.xpose.msra.mxu0 0.0
    %97 = vmatpush.xpose.msra.mxu0 0.0
    %98 = vmatpush.xpose.msra.mxu0 0.0
    %99 = vmatpush.xpose.msra.mxu0 %v82
    %100 = vmatmul.f32.gmra.mxu0 %v80
    %v101 = vpop.f32.mrf.mxu0
    %v102 = vadd.f32 0.0, %v101
    %103 = vdwg.mxu0
    %vm104 = vcmask 64512
    %v105 = vsel %vm104, %v102, -inf
    %106 = vmax.xlane.f32.xlu0 %v105
    %v107 = vpop.xlane.xlu0 %106
    %v108 = vsub.f32 %v102, %v107
    %v109 = vmul.f32 %v108, 1.442695
    %v110 = vpow.pop %v109
    %v111 = vsel %vm104, %v110, 0.0
    %112 = vadd.xlane.f32.xlu0 %v111
    %v113 = vpop.xlane.xlu0 %112
    %v114 = vrcp.pop %v113
    %v115 = vmul.f32 %v113, %v114
    %v116 = vsub.f32 1.0, %v115
    %v117 = vmul.f32 %v114, %v116
    %v118 = vadd.f32 %v114, %v117
    %vm119 = vweird.f32 %v113
    %vm120 = vweird.f32 %v114
    %vm121 = vmor %vm119, %vm120
    %v122 = vsel %vm121, %v114, %v118
    %v123 = vand.u32 2147483647, %v113
    %vm124 = vcmp.eq.f32.partialorder %v123, 8.507059e+37
    %v125 = vand.u32 %v113, 2147483648
    %v126 = vor.u32 1.1754944e-38, %v125
    %v127 = vsel %vm124, %v126, %v122
    %v128 = vmul.f32 %v110, %v127
    %129 = vrot.lane.b32.xlu0 %v68, 64
    %v130 = vpop.permute.xlu0 %129
    %v133 = vsel %vm104, %v128, 0
    %135 = vmatpush.msra.mxu0 0.0
    %136 = vmatpush.msra.mxu0 0.0
    %137 = vmatpush.msra.mxu0 0.0
    %138 = vmatpush.msra.mxu0 0.0
    %139 = vmatpush.msra.mxu0 0.0
    %140 = vmatpush.msra.mxu0 0.0
    %141 = vmatpush.msra.mxu0 0.0
    %142 = vmatpush.msra.mxu0 0.0
    %143 = vmatpush.msra.mxu0 0.0
    %144 = vmatpush.msra.mxu0 0.0
    %145 = vmatpush.msra.mxu0 0.0
    %146 = vmatpush.msra.mxu0 0.0
    %147 = vmatpush.msra.mxu0 0.0
    %148 = vmatpush.msra.mxu0 0.0
    %149 = vmatpush.msra.mxu0 0.0
    %150 = vmatpush.msra.mxu0 %v130
    %151 = vmatmul.f32.gmra.mxu0 %v133
    %v152 = vpop.f32.mrf.mxu0
    %v153 = vadd.f32 0.0, %v152
    %154 = vdwg.mxu0
    %155 = vrot.lane.b32.xlu0 %v73, 124
    %v156 = vpop.permute.xlu0 %155
    %157 = vrot.lane.b32.xlu0 %v68, 92
    %v158 = vpop.permute.xlu0 %157
    %v159 = vsel %vm78, %v156, 0
    %v161 = vsel %vm78, %v158, 0
    %163 = vmatpush.xpose.msra.mxu0 0.0
    %164 = vmatpush.xpose.msra.mxu0 0.0
    %165 = vmatpush.xpose.msra.mxu0 0.0
    %166 = vmatpush.xpose.msra.mxu0 0.0
    %167 = vmatpush.xpose.msra.mxu0 0.0
    %168 = vmatpush.xpose.msra.mxu0 0.0
    %169 = vmatpush.xpose.msra.mxu0 0.0
    %170 = vmatpush.xpose.msra.mxu0 0.0
    %171 = vmatpush.xpose.msra.mxu0 0.0
    %172 = vmatpush.xpose.msra.mxu0 0.0
    %173 = vmatpush.xpose.msra.mxu0 0.0
    %174 = vmatpush.xpose.msra.mxu0 0.0
    %175 = vmatpush.xpose.msra.mxu0 0.0
    %176 = vmatpush.xpose.msra.mxu0 0.0
    %177 = vmatpush.xpose.msra.mxu0 0.0
    %178 = vmatpush.xpose.msra.mxu0 %v161
    %179 = vmatmul.f32.gmra.mxu0 %v159
    %v180 = vpop.f32.mrf.mxu0
    %v181 = vadd.f32 0.0, %v180
    %182 = vdwg.mxu0
    %v183 = vsel %vm104, %v181, -inf
    %184 = vmax.xlane.f32.xlu0 %v183
    %v185 = vpop.xlane.xlu0 %184
    %v186 = vsub.f32 %v181, %v185
    %v187 = vmul.f32 %v186, 1.442695
    %v188 = vpow.pop %v187
    %v189 = vsel %vm104, %v188, 0.0
    %190 = vadd.xlane.f32.xlu0 %v189
    %v191 = vpop.xlane.xlu0 %190
    %v192 = vrcp.pop %v191
    %v193 = vmul.f32 %v191, %v192
    %v194 = vsub.f32 1.0, %v193
    %v195 = vmul.f32 %v192, %v194
    %v196 = vadd.f32 %v192, %v195
    %vm197 = vweird.f32 %v191
    %vm198 = vweird.f32 %v192
    %vm199 = vmor %vm197, %vm198
    %v200 = vsel %vm199, %v192, %v196
    %v201 = vand.u32 2147483647, %v191
    %vm202 = vcmp.eq.f32.partialorder %v201, 8.507059e+37
    %v203 = vand.u32 %v191, 2147483648
    %v204 = vor.u32 1.1754944e-38, %v203
    %v205 = vsel %vm202, %v204, %v200
    %v206 = vmul.f32 %v188, %v205
    %207 = vrot.lane.b32.xlu0 %v68, 60
    %v208 = vpop.permute.xlu0 %207
    %v211 = vsel %vm104, %v206, 0
    %213 = vmatpush.msra.mxu0 0.0
    %214 = vmatpush.msra.mxu0 0.0
    %215 = vmatpush.msra.mxu0 0.0
    %216 = vmatpush.msra.mxu0 0.0
    %217 = vmatpush.msra.mxu0 0.0
    %218 = vmatpush.msra.mxu0 0.0
    %219 = vmatpush.msra.mxu0 0.0
    %220 = vmatpush.msra.mxu0 0.0
    %221 = vmatpush.msra.mxu0 0.0
    %222 = vmatpush.msra.mxu0 0.0
    %223 = vmatpush.msra.mxu0 0.0
    %224 = vmatpush.msra.mxu0 0.0
    %225 = vmatpush.msra.mxu0 0.0
    %226 = vmatpush.msra.mxu0 0.0
    %227 = vmatpush.msra.mxu0 0.0
    %228 = vmatpush.msra.mxu0 %v208
    %229 = vmatmul.f32.gmra.mxu0 %v211
    %v230 = vpop.f32.mrf.mxu0
    %v231 = vadd.f32 0.0, %v230
    %232 = vdwg.mxu0
    %233 = vrot.lane.b32.xlu0 %v73, 120
    %v234 = vpop.permute.xlu0 %233
    %235 = vrot.lane.b32.xlu0 %v68, 88
    %v236 = vpop.permute.xlu0 %235
    %v237 = vsel %vm78, %v234, 0
    %v239 = vsel %vm78, %v236, 0
    %241 = vmatpush.xpose.msra.mxu0 0.0
    %242 = vmatpush.xpose.msra.mxu0 0.0
    %243 = vmatpush.xpose.msra.mxu0 0.0
    %244 = vmatpush.xpose.msra.mxu0 0.0
    %245 = vmatpush.xpose.msra.mxu0 0.0
    %246 = vmatpush.xpose.msra.mxu0 0.0
    %247 = vmatpush.xpose.msra.mxu0 0.0
    %248 = vmatpush.xpose.msra.mxu0 0.0
    %249 = vmatpush.xpose.msra.mxu0 0.0
    %250 = vmatpush.xpose.msra.mxu0 0.0
    %251 = vmatpush.xpose.msra.mxu0 0.0
    %252 = vmatpush.xpose.msra.mxu0 0.0
    %253 = vmatpush.xpose.msra.mxu0 0.0
    %254 = vmatpush.xpose.msra.mxu0 0.0
    %255 = vmatpush.xpose.msra.mxu0 0.0
    %256 = vmatpush.xpose.msra.mxu0 %v239
    %257 = vmatmul.f32.gmra.mxu0 %v237
    %v258 = vpop.f32.mrf.mxu0
    %v259 = vadd.f32 0.0, %v258
    %260 = vdwg.mxu0
    %v261 = vsel %vm104, %v259, -inf
    %262 = vmax.xlane.f32.xlu0 %v261
    %v263 = vpop.xlane.xlu0 %262
    %v264 = vsub.f32 %v259, %v263
    %v265 = vmul.f32 %v264, 1.442695
    %v266 = vpow.pop %v265
    %v267 = vsel %vm104, %v266, 0.0
    %268 = vadd.xlane.f32.xlu0 %v267
    %v269 = vpop.xlane.xlu0 %268
    %v270 = vrcp.pop %v269
    %v271 = vmul.f32 %v269, %v270
    %v272 = vsub.f32 1.0, %v271
    %v273 = vmul.f32 %v270, %v272
    %v274 = vadd.f32 %v270, %v273
    %vm275 = vweird.f32 %v269
    %vm276 = vweird.f32 %v270
    %vm277 = vmor %vm275, %vm276
    %v278 = vsel %vm277, %v270, %v274
    %v279 = vand.u32 2147483647, %v269
    %vm280 = vcmp.eq.f32.partialorder %v279, 8.507059e+37
    %v281 = vand.u32 %v269, 2147483648
    %v282 = vor.u32 1.1754944e-38, %v281
    %v283 = vsel %vm280, %v282, %v278
    %v284 = vmul.f32 %v266, %v283
    %285 = vrot.lane.b32.xlu0 %v68, 56
    %v286 = vpop.permute.xlu0 %285
    %v289 = vsel %vm104, %v284, 0
    %291 = vmatpush.msra.mxu0 0.0
    %292 = vmatpush.msra.mxu0 0.0
    %293 = vmatpush.msra.mxu0 0.0
    %294 = vmatpush.msra.mxu0 0.0
    %295 = vmatpush.msra.mxu0 0.0
    %296 = vmatpush.msra.mxu0 0.0
    %297 = vmatpush.msra.mxu0 0.0
    %298 = vmatpush.msra.mxu0 0.0
    %299 = vmatpush.msra.mxu0 0.0
    %300 = vmatpush.msra.mxu0 0.0
    %301 = vmatpush.msra.mxu0 0.0
    %302 = vmatpush.msra.mxu0 0.0
    %303 = vmatpush.msra.mxu0 0.0
    %304 = vmatpush.msra.mxu0 0.0
    %305 = vmatpush.msra.mxu0 0.0
    %306 = vmatpush.msra.mxu0 %v286
    %307 = vmatmul.f32.gmra.mxu0 %v289
    %v308 = vpop.f32.mrf.mxu0
    %v309 = vadd.f32 0.0, %v308
    %310 = vdwg.mxu0
    %311 = vrot.lane.b32.xlu0 %v73, 116
    %v312 = vpop.permute.xlu0 %311
    %313 = vrot.lane.b32.xlu0 %v68, 84
    %v314 = vpop.permute.xlu0 %313
    %v315 = vsel %vm78, %v312, 0
    %v317 = vsel %vm78, %v314, 0
    %319 = vmatpush.xpose.msra.mxu0 0.0
    %320 = vmatpush.xpose.msra.mxu0 0.0
    %321 = vmatpush.xpose.msra.mxu0 0.0
    %322 = vmatpush.xpose.msra.mxu0 0.0
    %323 = vmatpush.xpose.msra.mxu0 0.0
    %324 = vmatpush.xpose.msra.mxu0 0.0
    %325 = vmatpush.xpose.msra.mxu0 0.0
    %326 = vmatpush.xpose.msra.mxu0 0.0
    %327 = vmatpush.xpose.msra.mxu0 0.0
    %328 = vmatpush.xpose.msra.mxu0 0.0
    %329 = vmatpush.xpose.msra.mxu0 0.0
    %330 = vmatpush.xpose.msra.mxu0 0.0
    %331 = vmatpush.xpose.msra.mxu0 0.0
    %332 = vmatpush.xpose.msra.mxu0 0.0
    %333 = vmatpush.xpose.msra.mxu0 0.0
    %334 = vmatpush.xpose.msra.mxu0 %v317
    %335 = vmatmul.f32.gmra.mxu0 %v315
    %v336 = vpop.f32.mrf.mxu0
    %v337 = vadd.f32 0.0, %v336
    %338 = vdwg.mxu0
    %v339 = vsel %vm104, %v337, -inf
    %340 = vmax.xlane.f32.xlu0 %v339
    %v341 = vpop.xlane.xlu0 %340
    %v342 = vsub.f32 %v337, %v341
    %v343 = vmul.f32 %v342, 1.442695
    %v344 = vpow.pop %v343
    %v345 = vsel %vm104, %v344, 0.0
    %346 = vadd.xlane.f32.xlu0 %v345
    %v347 = vpop.xlane.xlu0 %346
    %v348 = vrcp.pop %v347
    %v349 = vmul.f32 %v347, %v348
    %v350 = vsub.f32 1.0, %v349
    %v351 = vmul.f32 %v348, %v350
    %v352 = vadd.f32 %v348, %v351
    %vm353 = vweird.f32 %v347
    %vm354 = vweird.f32 %v348
    %vm355 = vmor %vm353, %vm354
    %v356 = vsel %vm355, %v348, %v352
    %v357 = vand.u32 2147483647, %v347
    %vm358 = vcmp.eq.f32.partialorder %v357, 8.507059e+37
    %v359 = vand.u32 %v347, 2147483648
    %v360 = vor.u32 1.1754944e-38, %v359
    %v361 = vsel %vm358, %v360, %v356
    %v362 = vmul.f32 %v344, %v361
    %363 = vrot.lane.b32.xlu0 %v68, 52
    %v364 = vpop.permute.xlu0 %363
    %v367 = vsel %vm104, %v362, 0
    %369 = vmatpush.msra.mxu0 0.0
    %370 = vmatpush.msra.mxu0 0.0
    %371 = vmatpush.msra.mxu0 0.0
    %372 = vmatpush.msra.mxu0 0.0
    %373 = vmatpush.msra.mxu0 0.0
    %374 = vmatpush.msra.mxu0 0.0
    %375 = vmatpush.msra.mxu0 0.0
    %376 = vmatpush.msra.mxu0 0.0
    %377 = vmatpush.msra.mxu0 0.0
    %378 = vmatpush.msra.mxu0 0.0
    %379 = vmatpush.msra.mxu0 0.0
    %380 = vmatpush.msra.mxu0 0.0
    %381 = vmatpush.msra.mxu0 0.0
    %382 = vmatpush.msra.mxu0 0.0
    %383 = vmatpush.msra.mxu0 0.0
    %384 = vmatpush.msra.mxu0 %v364
    %385 = vmatmul.f32.gmra.mxu0 %v367
    %v386 = vpop.f32.mrf.mxu0
    %v387 = vadd.f32 0.0, %v386
    %388 = vdwg.mxu0
    %389 = vrot.lane.b32.xlu0 %v73, 112
    %v390 = vpop.permute.xlu0 %389
    %391 = vrot.lane.b32.xlu0 %v68, 80
    %v392 = vpop.permute.xlu0 %391
    %v393 = vsel %vm78, %v390, 0
    %v395 = vsel %vm78, %v392, 0
    %397 = vmatpush.xpose.msra.mxu0 0.0
    %398 = vmatpush.xpose.msra.mxu0 0.0
    %399 = vmatpush.xpose.msra.mxu0 0.0
    %400 = vmatpush.xpose.msra.mxu0 0.0
    %401 = vmatpush.xpose.msra.mxu0 0.0
    %402 = vmatpush.xpose.msra.mxu0 0.0
    %403 = vmatpush.xpose.msra.mxu0 0.0
    %404 = vmatpush.xpose.msra.mxu0 0.0
    %405 = vmatpush.xpose.msra.mxu0 0.0
    %406 = vmatpush.xpose.msra.mxu0 0.0
    %407 = vmatpush.xpose.msra.mxu0 0.0
    %408 = vmatpush.xpose.msra.mxu0 0.0
    %409 = vmatpush.xpose.msra.mxu0 0.0
    %410 = vmatpush.xpose.msra.mxu0 0.0
    %411 = vmatpush.xpose.msra.mxu0 0.0
    %412 = vmatpush.xpose.msra.mxu0 %v395
    %413 = vmatmul.f32.gmra.mxu0 %v393
    %v414 = vpop.f32.mrf.mxu0
    %v415 = vadd.f32 0.0, %v414
    %416 = vdwg.mxu0
    %v417 = vsel %vm104, %v415, -inf
    %418 = vmax.xlane.f32.xlu0 %v417
    %v419 = vpop.xlane.xlu0 %418
    %v420 = vsub.f32 %v415, %v419
    %v421 = vmul.f32 %v420, 1.442695
    %v422 = vpow.pop %v421
    %v423 = vsel %vm104, %v422, 0.0
    %424 = vadd.xlane.f32.xlu0 %v423
    %v425 = vpop.xlane.xlu0 %424
    %v426 = vrcp.pop %v425
    %v427 = vmul.f32 %v425, %v426
    %v428 = vsub.f32 1.0, %v427
    %v429 = vmul.f32 %v426, %v428
    %v430 = vadd.f32 %v426, %v429
    %vm431 = vweird.f32 %v425
    %vm432 = vweird.f32 %v426
    %vm433 = vmor %vm431, %vm432
    %v434 = vsel %vm433, %v426, %v430
    %v435 = vand.u32 2147483647, %v425
    %vm436 = vcmp.eq.f32.partialorder %v435, 8.507059e+37
    %v437 = vand.u32 %v425, 2147483648
    %v438 = vor.u32 1.1754944e-38, %v437
    %v439 = vsel %vm436, %v438, %v434
    %v440 = vmul.f32 %v422, %v439
    %441 = vrot.lane.b32.xlu0 %v68, 48
    %v442 = vpop.permute.xlu0 %441
    %v445 = vsel %vm104, %v440, 0
    %447 = vmatpush.msra.mxu0 0.0
    %448 = vmatpush.msra.mxu0 0.0
    %449 = vmatpush.msra.mxu0 0.0
    %450 = vmatpush.msra.mxu0 0.0
    %451 = vmatpush.msra.mxu0 0.0
    %452 = vmatpush.msra.mxu0 0.0
    %453 = vmatpush.msra.mxu0 0.0
    %454 = vmatpush.msra.mxu0 0.0
    %455 = vmatpush.msra.mxu0 0.0
    %456 = vmatpush.msra.mxu0 0.0
    %457 = vmatpush.msra.mxu0 0.0
    %458 = vmatpush.msra.mxu0 0.0
    %459 = vmatpush.msra.mxu0 0.0
    %460 = vmatpush.msra.mxu0 0.0
    %461 = vmatpush.msra.mxu0 0.0
    %462 = vmatpush.msra.mxu0 %v442
    %463 = vmatmul.f32.gmra.mxu0 %v445
    %v464 = vpop.f32.mrf.mxu0
    %v465 = vadd.f32 0.0, %v464
    %466 = vdwg.mxu0
    %467 = vrot.lane.b32.xlu0 %v73, 108
    %v468 = vpop.permute.xlu0 %467
    %469 = vrot.lane.b32.xlu0 %v68, 76
    %v470 = vpop.permute.xlu0 %469
    %v471 = vsel %vm78, %v468, 0
    %v473 = vsel %vm78, %v470, 0
    %475 = vmatpush.xpose.msra.mxu0 0.0
    %476 = vmatpush.xpose.msra.mxu0 0.0
    %477 = vmatpush.xpose.msra.mxu0 0.0
    %478 = vmatpush.xpose.msra.mxu0 0.0
    %479 = vmatpush.xpose.msra.mxu0 0.0
    %480 = vmatpush.xpose.msra.mxu0 0.0
    %481 = vmatpush.xpose.msra.mxu0 0.0
    %482 = vmatpush.xpose.msra.mxu0 0.0
    %483 = vmatpush.xpose.msra.mxu0 0.0
    %484 = vmatpush.xpose.msra.mxu0 0.0
    %485 = vmatpush.xpose.msra.mxu0 0.0
    %486 = vmatpush.xpose.msra.mxu0 0.0
    %487 = vmatpush.xpose.msra.mxu0 0.0
    %488 = vmatpush.xpose.msra.mxu0 0.0
    %489 = vmatpush.xpose.msra.mxu0 0.0
    %490 = vmatpush.xpose.msra.mxu0 %v473
    %491 = vmatmul.f32.gmra.mxu0 %v471
    %v492 = vpop.f32.mrf.mxu0
    %v493 = vadd.f32 0.0, %v492
    %494 = vdwg.mxu0
    %v495 = vsel %vm104, %v493, -inf
    %496 = vmax.xlane.f32.xlu0 %v495
    %v497 = vpop.xlane.xlu0 %496
    %v498 = vsub.f32 %v493, %v497
    %v499 = vmul.f32 %v498, 1.442695
    %v500 = vpow.pop %v499
    %v501 = vsel %vm104, %v500, 0.0
    %502 = vadd.xlane.f32.xlu0 %v501
    %v503 = vpop.xlane.xlu0 %502
    %v504 = vrcp.pop %v503
    %v505 = vmul.f32 %v503, %v504
    %v506 = vsub.f32 1.0, %v505
    %v507 = vmul.f32 %v504, %v506
    %v508 = vadd.f32 %v504, %v507
    %vm509 = vweird.f32 %v503
    %vm510 = vweird.f32 %v504
    %vm511 = vmor %vm509, %vm510
    %v512 = vsel %vm511, %v504, %v508
    %v513 = vand.u32 2147483647, %v503
    %vm514 = vcmp.eq.f32.partialorder %v513, 8.507059e+37
    %v515 = vand.u32 %v503, 2147483648
    %v516 = vor.u32 1.1754944e-38, %v515
    %v517 = vsel %vm514, %v516, %v512
    %v518 = vmul.f32 %v500, %v517
    %519 = vrot.lane.b32.xlu0 %v68, 44
    %v520 = vpop.permute.xlu0 %519
    %v523 = vsel %vm104, %v518, 0
    %525 = vmatpush.msra.mxu0 0.0
    %526 = vmatpush.msra.mxu0 0.0
    %527 = vmatpush.msra.mxu0 0.0
    %528 = vmatpush.msra.mxu0 0.0
    %529 = vmatpush.msra.mxu0 0.0
    %530 = vmatpush.msra.mxu0 0.0
    %531 = vmatpush.msra.mxu0 0.0
    %532 = vmatpush.msra.mxu0 0.0
    %533 = vmatpush.msra.mxu0 0.0
    %534 = vmatpush.msra.mxu0 0.0
    %535 = vmatpush.msra.mxu0 0.0
    %536 = vmatpush.msra.mxu0 0.0
    %537 = vmatpush.msra.mxu0 0.0
    %538 = vmatpush.msra.mxu0 0.0
    %539 = vmatpush.msra.mxu0 0.0
    %540 = vmatpush.msra.mxu0 %v520
    %541 = vmatmul.f32.gmra.mxu0 %v523
    %v542 = vpop.f32.mrf.mxu0
    %v543 = vadd.f32 0.0, %v542
    %544 = vdwg.mxu0
    %545 = vrot.lane.b32.xlu0 %v73, 104
    %v546 = vpop.permute.xlu0 %545
    %547 = vrot.lane.b32.xlu0 %v68, 72
    %v548 = vpop.permute.xlu0 %547
    %v549 = vsel %vm78, %v546, 0
    %v551 = vsel %vm78, %v548, 0
    %553 = vmatpush.xpose.msra.mxu0 0.0
    %554 = vmatpush.xpose.msra.mxu0 0.0
    %555 = vmatpush.xpose.msra.mxu0 0.0
    %556 = vmatpush.xpose.msra.mxu0 0.0
    %557 = vmatpush.xpose.msra.mxu0 0.0
    %558 = vmatpush.xpose.msra.mxu0 0.0
    %559 = vmatpush.xpose.msra.mxu0 0.0
    %560 = vmatpush.xpose.msra.mxu0 0.0
    %561 = vmatpush.xpose.msra.mxu0 0.0
    %562 = vmatpush.xpose.msra.mxu0 0.0
    %563 = vmatpush.xpose.msra.mxu0 0.0
    %564 = vmatpush.xpose.msra.mxu0 0.0
    %565 = vmatpush.xpose.msra.mxu0 0.0
    %566 = vmatpush.xpose.msra.mxu0 0.0
    %567 = vmatpush.xpose.msra.mxu0 0.0
    %568 = vmatpush.xpose.msra.mxu0 %v551
    %569 = vmatmul.f32.gmra.mxu0 %v549
    %v570 = vpop.f32.mrf.mxu0
    %v571 = vadd.f32 0.0, %v570
    %572 = vdwg.mxu0
    %v573 = vsel %vm104, %v571, -inf
    %574 = vmax.xlane.f32.xlu0 %v573
    %v575 = vpop.xlane.xlu0 %574
    %v576 = vsub.f32 %v571, %v575
    %v577 = vmul.f32 %v576, 1.442695
    %v578 = vpow.pop %v577
    %v579 = vsel %vm104, %v578, 0.0
    %580 = vadd.xlane.f32.xlu0 %v579
    %v581 = vpop.xlane.xlu0 %580
    %v582 = vrcp.pop %v581
    %v583 = vmul.f32 %v581, %v582
    %v584 = vsub.f32 1.0, %v583
    %v585 = vmul.f32 %v582, %v584
    %v586 = vadd.f32 %v582, %v585
    %vm587 = vweird.f32 %v581
    %vm588 = vweird.f32 %v582
    %vm589 = vmor %vm587, %vm588
    %v590 = vsel %vm589, %v582, %v586
    %v591 = vand.u32 2147483647, %v581
    %vm592 = vcmp.eq.f32.partialorder %v591, 8.507059e+37
    %v593 = vand.u32 %v581, 2147483648
    %v594 = vor.u32 1.1754944e-38, %v593
    %v595 = vsel %vm592, %v594, %v590
    %v596 = vmul.f32 %v578, %v595
    %597 = vrot.lane.b32.xlu0 %v68, 40
    %v598 = vpop.permute.xlu0 %597
    %v601 = vsel %vm104, %v596, 0
    %603 = vmatpush.msra.mxu0 0.0
    %604 = vmatpush.msra.mxu0 0.0
    %605 = vmatpush.msra.mxu0 0.0
    %606 = vmatpush.msra.mxu0 0.0
    %607 = vmatpush.msra.mxu0 0.0
    %608 = vmatpush.msra.mxu0 0.0
    %609 = vmatpush.msra.mxu0 0.0
    %610 = vmatpush.msra.mxu0 0.0
    %611 = vmatpush.msra.mxu0 0.0
    %612 = vmatpush.msra.mxu0 0.0
    %613 = vmatpush.msra.mxu0 0.0
    %614 = vmatpush.msra.mxu0 0.0
    %615 = vmatpush.msra.mxu0 0.0
    %616 = vmatpush.msra.mxu0 0.0
    %617 = vmatpush.msra.mxu0 0.0
    %618 = vmatpush.msra.mxu0 %v598
    %619 = vmatmul.f32.gmra.mxu0 %v601
    %v620 = vpop.f32.mrf.mxu0
    %v621 = vadd.f32 0.0, %v620
    %622 = vdwg.mxu0
    %623 = vrot.lane.b32.xlu0 %v73, 100
    %v624 = vpop.permute.xlu0 %623
    %625 = vrot.lane.b32.xlu0 %v68, 68
    %v626 = vpop.permute.xlu0 %625
    %v627 = vsel %vm78, %v624, 0
    %v629 = vsel %vm78, %v626, 0
    %631 = vmatpush.xpose.msra.mxu0 0.0
    %632 = vmatpush.xpose.msra.mxu0 0.0
    %633 = vmatpush.xpose.msra.mxu0 0.0
    %634 = vmatpush.xpose.msra.mxu0 0.0
    %635 = vmatpush.xpose.msra.mxu0 0.0
    %636 = vmatpush.xpose.msra.mxu0 0.0
    %637 = vmatpush.xpose.msra.mxu0 0.0
    %638 = vmatpush.xpose.msra.mxu0 0.0
    %639 = vmatpush.xpose.msra.mxu0 0.0
    %640 = vmatpush.xpose.msra.mxu0 0.0
    %641 = vmatpush.xpose.msra.mxu0 0.0
    %642 = vmatpush.xpose.msra.mxu0 0.0
    %643 = vmatpush.xpose.msra.mxu0 0.0
    %644 = vmatpush.xpose.msra.mxu0 0.0
    %645 = vmatpush.xpose.msra.mxu0 0.0
    %646 = vmatpush.xpose.msra.mxu0 %v629
    %647 = vmatmul.f32.gmra.mxu0 %v627
    %v648 = vpop.f32.mrf.mxu0
    %v649 = vadd.f32 0.0, %v648
    %650 = vdwg.mxu0
    %v651 = vsel %vm104, %v649, -inf
    %652 = vmax.xlane.f32.xlu0 %v651
    %v653 = vpop.xlane.xlu0 %652
    %v654 = vsub.f32 %v649, %v653
    %v655 = vmul.f32 %v654, 1.442695
    %v656 = vpow.pop %v655
    %v657 = vsel %vm104, %v656, 0.0
    %658 = vadd.xlane.f32.xlu0 %v657
    %v659 = vpop.xlane.xlu0 %658
    %v660 = vrcp.pop %v659
    %v661 = vmul.f32 %v659, %v660
    %v662 = vsub.f32 1.0, %v661
    %v663 = vmul.f32 %v660, %v662
    %v664 = vadd.f32 %v660, %v663
    %vm665 = vweird.f32 %v659
    %vm666 = vweird.f32 %v660
    %vm667 = vmor %vm665, %vm666
    %v668 = vsel %vm667, %v660, %v664
    %v669 = vand.u32 2147483647, %v659
    %vm670 = vcmp.eq.f32.partialorder %v669, 8.507059e+37
    %v671 = vand.u32 %v659, 2147483648
    %v672 = vor.u32 1.1754944e-38, %v671
    %v673 = vsel %vm670, %v672, %v668
    %v674 = vmul.f32 %v656, %v673
    %675 = vrot.lane.b32.xlu0 %v68, 36
    %v676 = vpop.permute.xlu0 %675
    %v679 = vsel %vm104, %v674, 0
    %681 = vmatpush.msra.mxu0 0.0
    %682 = vmatpush.msra.mxu0 0.0
    %683 = vmatpush.msra.mxu0 0.0
    %684 = vmatpush.msra.mxu0 0.0
    %685 = vmatpush.msra.mxu0 0.0
    %686 = vmatpush.msra.mxu0 0.0
    %687 = vmatpush.msra.mxu0 0.0
    %688 = vmatpush.msra.mxu0 0.0
    %689 = vmatpush.msra.mxu0 0.0
    %690 = vmatpush.msra.mxu0 0.0
    %691 = vmatpush.msra.mxu0 0.0
    %692 = vmatpush.msra.mxu0 0.0
    %693 = vmatpush.msra.mxu0 0.0
    %694 = vmatpush.msra.mxu0 0.0
    %695 = vmatpush.msra.mxu0 0.0
    %696 = vmatpush.msra.mxu0 %v676
    %697 = vmatmul.f32.gmra.mxu0 %v679
    %v698 = vpop.f32.mrf.mxu0
    %v699 = vadd.f32 0.0, %v698
    %700 = vdwg.mxu0
    %702 = vrot.lane.b32.xlu0 %v231, 4
    %v703 = vpop.permute.xlu0 %702
    %706 = vrot.lane.b32.xlu0 %v309, 8
    %v707 = vpop.permute.xlu0 %706
    %710 = vrot.lane.b32.xlu0 %v387, 12
    %v711 = vpop.permute.xlu0 %710
    %714 = vrot.lane.b32.xlu0 %v465, 16
    %v715 = vpop.permute.xlu0 %714
    %718 = vrot.lane.b32.xlu0 %v543, 20
    %v719 = vpop.permute.xlu0 %718
    %722 = vrot.lane.b32.xlu0 %v621, 24
    %v723 = vpop.permute.xlu0 %722
    %726 = vrot.lane.b32.xlu0 %v699, 28
    %v727 = vpop.permute.xlu0 %726
    %v729 = vsel %vm78, %v153, %v703
    %v730 = vsel %vm104, %v729, %v707
    %vm731 = vcmask 97280
    %v732 = vsel %vm731, %v730, %v711
    %vm733 = vcmask 130048
    %v734 = vsel %vm733, %v732, %v715
    %vm735 = vcmask 162816
    %v736 = vsel %vm735, %v734, %v719
    %vm737 = vcmask 195584
    %v738 = vsel %vm737, %v736, %v723
    %vm739 = vcmask 228352
    %v740 = vsel %vm739, %v738, %v727
    %742 = vrot.lane.b32.xlu0 %v71, 96
    %v743 = vpop.permute.xlu0 %742
    %v745 = vsel %vm78, %v74, 0
    %v747 = vsel %vm78, %v743, 0
    %749 = vmatpush.xpose.msra.mxu0 0.0
    %750 = vmatpush.xpose.msra.mxu0 0.0
    %751 = vmatpush.xpose.msra.mxu0 0.0
    %752 = vmatpush.xpose.msra.mxu0 0.0
    %753 = vmatpush.xpose.msra.mxu0 0.0
    %754 = vmatpush.xpose.msra.mxu0 0.0
    %755 = vmatpush.xpose.msra.mxu0 0.0
    %756 = vmatpush.xpose.msra.mxu0 0.0
    %757 = vmatpush.xpose.msra.mxu0 0.0
    %758 = vmatpush.xpose.msra.mxu0 0.0
    %759 = vmatpush.xpose.msra.mxu0 0.0
    %760 = vmatpush.xpose.msra.mxu0 0.0
    %761 = vmatpush.xpose.msra.mxu0 0.0
    %762 = vmatpush.xpose.msra.mxu0 0.0
    %763 = vmatpush.xpose.msra.mxu0 0.0
    %764 = vmatpush.xpose.msra.mxu0 %v747
    %765 = vmatmul.f32.gmra.mxu0 %v745
    %v766 = vpop.f32.mrf.mxu0
    %v767 = vadd.f32 0.0, %v766
    %768 = vdwg.mxu0
    %v769 = vsel %vm104, %v767, -inf
    %770 = vmax.xlane.f32.xlu0 %v769
    %v771 = vpop.xlane.xlu0 %770
    %v772 = vsub.f32 %v767, %v771
    %v773 = vmul.f32 %v772, 1.442695
    %v774 = vpow.pop %v773
    %v775 = vsel %vm104, %v774, 0.0
    %776 = vadd.xlane.f32.xlu0 %v775
    %v777 = vpop.xlane.xlu0 %776
    %v778 = vrcp.pop %v777
    %v779 = vmul.f32 %v777, %v778
    %v780 = vsub.f32 1.0, %v779
    %v781 = vmul.f32 %v778, %v780
    %v782 = vadd.f32 %v778, %v781
    %vm783 = vweird.f32 %v777
    %vm784 = vweird.f32 %v778
    %vm785 = vmor %vm783, %vm784
    %v786 = vsel %vm785, %v778, %v782
    %v787 = vand.u32 2147483647, %v777
    %vm788 = vcmp.eq.f32.partialorder %v787, 8.507059e+37
    %v789 = vand.u32 %v777, 2147483648
    %v790 = vor.u32 1.1754944e-38, %v789
    %v791 = vsel %vm788, %v790, %v786
    %v792 = vmul.f32 %v774, %v791
    %793 = vrot.lane.b32.xlu0 %v71, 64
    %v794 = vpop.permute.xlu0 %793
    %v797 = vsel %vm104, %v792, 0
    %799 = vmatpush.msra.mxu0 0.0
    %800 = vmatpush.msra.mxu0 0.0
    %801 = vmatpush.msra.mxu0 0.0
    %802 = vmatpush.msra.mxu0 0.0
    %803 = vmatpush.msra.mxu0 0.0
    %804 = vmatpush.msra.mxu0 0.0
    %805 = vmatpush.msra.mxu0 0.0
    %806 = vmatpush.msra.mxu0 0.0
    %807 = vmatpush.msra.mxu0 0.0
    %808 = vmatpush.msra.mxu0 0.0
    %809 = vmatpush.msra.mxu0 0.0
    %810 = vmatpush.msra.mxu0 0.0
    %811 = vmatpush.msra.mxu0 0.0
    %812 = vmatpush.msra.mxu0 0.0
    %813 = vmatpush.msra.mxu0 0.0
    %814 = vmatpush.msra.mxu0 %v794
    %815 = vmatmul.f32.gmra.mxu0 %v797
    %v816 = vpop.f32.mrf.mxu0
    %v817 = vadd.f32 0.0, %v816
    %818 = vdwg.mxu0
    %819 = vrot.lane.b32.xlu0 %v74, 124
    %v820 = vpop.permute.xlu0 %819
    %821 = vrot.lane.b32.xlu0 %v71, 92
    %v822 = vpop.permute.xlu0 %821
    %v823 = vsel %vm78, %v820, 0
    %v825 = vsel %vm78, %v822, 0
    %827 = vmatpush.xpose.msra.mxu0 0.0
    %828 = vmatpush.xpose.msra.mxu0 0.0
    %829 = vmatpush.xpose.msra.mxu0 0.0
    %830 = vmatpush.xpose.msra.mxu0 0.0
    %831 = vmatpush.xpose.msra.mxu0 0.0
    %832 = vmatpush.xpose.msra.mxu0 0.0
    %833 = vmatpush.xpose.msra.mxu0 0.0
    %834 = vmatpush.xpose.msra.mxu0 0.0
    %835 = vmatpush.xpose.msra.mxu0 0.0
    %836 = vmatpush.xpose.msra.mxu0 0.0
    %837 = vmatpush.xpose.msra.mxu0 0.0
    %838 = vmatpush.xpose.msra.mxu0 0.0
    %839 = vmatpush.xpose.msra.mxu0 0.0
    %840 = vmatpush.xpose.msra.mxu0 0.0
    %841 = vmatpush.xpose.msra.mxu0 0.0
    %842 = vmatpush.xpose.msra.mxu0 %v825
    %843 = vmatmul.f32.gmra.mxu0 %v823
    %v844 = vpop.f32.mrf.mxu0
    %v845 = vadd.f32 0.0, %v844
    %846 = vdwg.mxu0
    %v847 = vsel %vm104, %v845, -inf
    %848 = vmax.xlane.f32.xlu0 %v847
    %v849 = vpop.xlane.xlu0 %848
    %v850 = vsub.f32 %v845, %v849
    %v851 = vmul.f32 %v850, 1.442695
    %v852 = vpow.pop %v851
    %v853 = vsel %vm104, %v852, 0.0
    %854 = vadd.xlane.f32.xlu0 %v853
    %v855 = vpop.xlane.xlu0 %854
    %v856 = vrcp.pop %v855
    %v857 = vmul.f32 %v855, %v856
    %v858 = vsub.f32 1.0, %v857
    %v859 = vmul.f32 %v856, %v858
    %v860 = vadd.f32 %v856, %v859
    %vm861 = vweird.f32 %v855
    %vm862 = vweird.f32 %v856
    %vm863 = vmor %vm861, %vm862
    %v864 = vsel %vm863, %v856, %v860
    %v865 = vand.u32 2147483647, %v855
    %vm866 = vcmp.eq.f32.partialorder %v865, 8.507059e+37
    %v867 = vand.u32 %v855, 2147483648
    %v868 = vor.u32 1.1754944e-38, %v867
    %v869 = vsel %vm866, %v868, %v864
    %v870 = vmul.f32 %v852, %v869
    %871 = vrot.lane.b32.xlu0 %v71, 60
    %v872 = vpop.permute.xlu0 %871
    %v875 = vsel %vm104, %v870, 0
    %877 = vmatpush.msra.mxu0 0.0
    %878 = vmatpush.msra.mxu0 0.0
    %879 = vmatpush.msra.mxu0 0.0
    %880 = vmatpush.msra.mxu0 0.0
    %881 = vmatpush.msra.mxu0 0.0
    %882 = vmatpush.msra.mxu0 0.0
    %883 = vmatpush.msra.mxu0 0.0
    %884 = vmatpush.msra.mxu0 0.0
    %885 = vmatpush.msra.mxu0 0.0
    %886 = vmatpush.msra.mxu0 0.0
    %887 = vmatpush.msra.mxu0 0.0
    %888 = vmatpush.msra.mxu0 0.0
    %889 = vmatpush.msra.mxu0 0.0
    %890 = vmatpush.msra.mxu0 0.0
    %891 = vmatpush.msra.mxu0 0.0
    %892 = vmatpush.msra.mxu0 %v872
    %893 = vmatmul.f32.gmra.mxu0 %v875
    %v894 = vpop.f32.mrf.mxu0
    %v895 = vadd.f32 0.0, %v894
    %896 = vdwg.mxu0
    %897 = vrot.lane.b32.xlu0 %v74, 120
    %v898 = vpop.permute.xlu0 %897
    %899 = vrot.lane.b32.xlu0 %v71, 88
    %v900 = vpop.permute.xlu0 %899
    %v901 = vsel %vm78, %v898, 0
    %v903 = vsel %vm78, %v900, 0
    %905 = vmatpush.xpose.msra.mxu0 0.0
    %906 = vmatpush.xpose.msra.mxu0 0.0
    %907 = vmatpush.xpose.msra.mxu0 0.0
    %908 = vmatpush.xpose.msra.mxu0 0.0
    %909 = vmatpush.xpose.msra.mxu0 0.0
    %910 = vmatpush.xpose.msra.mxu0 0.0
    %911 = vmatpush.xpose.msra.mxu0 0.0
    %912 = vmatpush.xpose.msra.mxu0 0.0
    %913 = vmatpush.xpose.msra.mxu0 0.0
    %914 = vmatpush.xpose.msra.mxu0 0.0
    %915 = vmatpush.xpose.msra.mxu0 0.0
    %916 = vmatpush.xpose.msra.mxu0 0.0
    %917 = vmatpush.xpose.msra.mxu0 0.0
    %918 = vmatpush.xpose.msra.mxu0 0.0
    %919 = vmatpush.xpose.msra.mxu0 0.0
    %920 = vmatpush.xpose.msra.mxu0 %v903
    %921 = vmatmul.f32.gmra.mxu0 %v901
    %v922 = vpop.f32.mrf.mxu0
    %v923 = vadd.f32 0.0, %v922
    %924 = vdwg.mxu0
    %v925 = vsel %vm104, %v923, -inf
    %926 = vmax.xlane.f32.xlu0 %v925
    %v927 = vpop.xlane.xlu0 %926
    %v928 = vsub.f32 %v923, %v927
    %v929 = vmul.f32 %v928, 1.442695
    %v930 = vpow.pop %v929
    %v931 = vsel %vm104, %v930, 0.0
    %932 = vadd.xlane.f32.xlu0 %v931
    %v933 = vpop.xlane.xlu0 %932
    %v934 = vrcp.pop %v933
    %v935 = vmul.f32 %v933, %v934
    %v936 = vsub.f32 1.0, %v935
    %v937 = vmul.f32 %v934, %v936
    %v938 = vadd.f32 %v934, %v937
    %vm939 = vweird.f32 %v933
    %vm940 = vweird.f32 %v934
    %vm941 = vmor %vm939, %vm940
    %v942 = vsel %vm941, %v934, %v938
    %v943 = vand.u32 2147483647, %v933
    %vm944 = vcmp.eq.f32.partialorder %v943, 8.507059e+37
    %v945 = vand.u32 %v933, 2147483648
    %v946 = vor.u32 1.1754944e-38, %v945
    %v947 = vsel %vm944, %v946, %v942
    %v948 = vmul.f32 %v930, %v947
    %949 = vrot.lane.b32.xlu0 %v71, 56
    %v950 = vpop.permute.xlu0 %949
    %v953 = vsel %vm104, %v948, 0
    %955 = vmatpush.msra.mxu0 0.0
    %956 = vmatpush.msra.mxu0 0.0
    %957 = vmatpush.msra.mxu0 0.0
    %958 = vmatpush.msra.mxu0 0.0
    %959 = vmatpush.msra.mxu0 0.0
    %960 = vmatpush.msra.mxu0 0.0
    %961 = vmatpush.msra.mxu0 0.0
    %962 = vmatpush.msra.mxu0 0.0
    %963 = vmatpush.msra.mxu0 0.0
    %964 = vmatpush.msra.mxu0 0.0
    %965 = vmatpush.msra.mxu0 0.0
    %966 = vmatpush.msra.mxu0 0.0
    %967 = vmatpush.msra.mxu0 0.0
    %968 = vmatpush.msra.mxu0 0.0
    %969 = vmatpush.msra.mxu0 0.0
    %970 = vmatpush.msra.mxu0 %v950
    %971 = vmatmul.f32.gmra.mxu0 %v953
    %v972 = vpop.f32.mrf.mxu0
    %v973 = vadd.f32 0.0, %v972
    %974 = vdwg.mxu0
    %975 = vrot.lane.b32.xlu0 %v74, 116
    %v976 = vpop.permute.xlu0 %975
    %977 = vrot.lane.b32.xlu0 %v71, 84
    %v978 = vpop.permute.xlu0 %977
    %v979 = vsel %vm78, %v976, 0
    %v981 = vsel %vm78, %v978, 0
    %983 = vmatpush.xpose.msra.mxu0 0.0
    %984 = vmatpush.xpose.msra.mxu0 0.0
    %985 = vmatpush.xpose.msra.mxu0 0.0
    %986 = vmatpush.xpose.msra.mxu0 0.0
    %987 = vmatpush.xpose.msra.mxu0 0.0
    %988 = vmatpush.xpose.msra.mxu0 0.0
    %989 = vmatpush.xpose.msra.mxu0 0.0
    %990 = vmatpush.xpose.msra.mxu0 0.0
    %991 = vmatpush.xpose.msra.mxu0 0.0
    %992 = vmatpush.xpose.msra.mxu0 0.0
    %993 = vmatpush.xpose.msra.mxu0 0.0
    %994 = vmatpush.xpose.msra.mxu0 0.0
    %995 = vmatpush.xpose.msra.mxu0 0.0
    %996 = vmatpush.xpose.msra.mxu0 0.0
    %997 = vmatpush.xpose.msra.mxu0 0.0
    %998 = vmatpush.xpose.msra.mxu0 %v981
    %999 = vmatmul.f32.gmra.mxu0 %v979
    %v1000 = vpop.f32.mrf.mxu0
    %v1001 = vadd.f32 0.0, %v1000
    %1002 = vdwg.mxu0
    %v1003 = vsel %vm104, %v1001, -inf
    %1004 = vmax.xlane.f32.xlu0 %v1003
    %v1005 = vpop.xlane.xlu0 %1004
    %v1006 = vsub.f32 %v1001, %v1005
    %v1007 = vmul.f32 %v1006, 1.442695
    %v1008 = vpow.pop %v1007
    %v1009 = vsel %vm104, %v1008, 0.0
    %1010 = vadd.xlane.f32.xlu0 %v1009
    %v1011 = vpop.xlane.xlu0 %1010
    %v1012 = vrcp.pop %v1011
    %v1013 = vmul.f32 %v1011, %v1012
    %v1014 = vsub.f32 1.0, %v1013
    %v1015 = vmul.f32 %v1012, %v1014
    %v1016 = vadd.f32 %v1012, %v1015
    %vm1017 = vweird.f32 %v1011
    %vm1018 = vweird.f32 %v1012
    %vm1019 = vmor %vm1017, %vm1018
    %v1020 = vsel %vm1019, %v1012, %v1016
    %v1021 = vand.u32 2147483647, %v1011
    %vm1022 = vcmp.eq.f32.partialorder %v1021, 8.507059e+37
    %v1023 = vand.u32 %v1011, 2147483648
    %v1024 = vor.u32 1.1754944e-38, %v1023
    %v1025 = vsel %vm1022, %v1024, %v1020
    %v1026 = vmul.f32 %v1008, %v1025
    %1027 = vrot.lane.b32.xlu0 %v71, 52
    %v1028 = vpop.permute.xlu0 %1027
    %v1031 = vsel %vm104, %v1026, 0
    %1033 = vmatpush.msra.mxu0 0.0
    %1034 = vmatpush.msra.mxu0 0.0
    %1035 = vmatpush.msra.mxu0 0.0
    %1036 = vmatpush.msra.mxu0 0.0
    %1037 = vmatpush.msra.mxu0 0.0
    %1038 = vmatpush.msra.mxu0 0.0
    %1039 = vmatpush.msra.mxu0 0.0
    %1040 = vmatpush.msra.mxu0 0.0
    %1041 = vmatpush.msra.mxu0 0.0
    %1042 = vmatpush.msra.mxu0 0.0
    %1043 = vmatpush.msra.mxu0 0.0
    %1044 = vmatpush.msra.mxu0 0.0
    %1045 = vmatpush.msra.mxu0 0.0
    %1046 = vmatpush.msra.mxu0 0.0
    %1047 = vmatpush.msra.mxu0 0.0
    %1048 = vmatpush.msra.mxu0 %v1028
    %1049 = vmatmul.f32.gmra.mxu0 %v1031
    %v1050 = vpop.f32.mrf.mxu0
    %v1051 = vadd.f32 0.0, %v1050
    %1052 = vdwg.mxu0
    %1053 = vrot.lane.b32.xlu0 %v74, 112
    %v1054 = vpop.permute.xlu0 %1053
    %1055 = vrot.lane.b32.xlu0 %v71, 80
    %v1056 = vpop.permute.xlu0 %1055
    %v1057 = vsel %vm78, %v1054, 0
    %v1059 = vsel %vm78, %v1056, 0
    %1061 = vmatpush.xpose.msra.mxu0 0.0
    %1062 = vmatpush.xpose.msra.mxu0 0.0
    %1063 = vmatpush.xpose.msra.mxu0 0.0
    %1064 = vmatpush.xpose.msra.mxu0 0.0
    %1065 = vmatpush.xpose.msra.mxu0 0.0
    %1066 = vmatpush.xpose.msra.mxu0 0.0
    %1067 = vmatpush.xpose.msra.mxu0 0.0
    %1068 = vmatpush.xpose.msra.mxu0 0.0
    %1069 = vmatpush.xpose.msra.mxu0 0.0
    %1070 = vmatpush.xpose.msra.mxu0 0.0
    %1071 = vmatpush.xpose.msra.mxu0 0.0
    %1072 = vmatpush.xpose.msra.mxu0 0.0
    %1073 = vmatpush.xpose.msra.mxu0 0.0
    %1074 = vmatpush.xpose.msra.mxu0 0.0
    %1075 = vmatpush.xpose.msra.mxu0 0.0
    %1076 = vmatpush.xpose.msra.mxu0 %v1059
    %1077 = vmatmul.f32.gmra.mxu0 %v1057
    %v1078 = vpop.f32.mrf.mxu0
    %v1079 = vadd.f32 0.0, %v1078
    %1080 = vdwg.mxu0
    %v1081 = vsel %vm104, %v1079, -inf
    %1082 = vmax.xlane.f32.xlu0 %v1081
    %v1083 = vpop.xlane.xlu0 %1082
    %v1084 = vsub.f32 %v1079, %v1083
    %v1085 = vmul.f32 %v1084, 1.442695
    %v1086 = vpow.pop %v1085
    %v1087 = vsel %vm104, %v1086, 0.0
    %1088 = vadd.xlane.f32.xlu0 %v1087
    %v1089 = vpop.xlane.xlu0 %1088
    %v1090 = vrcp.pop %v1089
    %v1091 = vmul.f32 %v1089, %v1090
    %v1092 = vsub.f32 1.0, %v1091
    %v1093 = vmul.f32 %v1090, %v1092
    %v1094 = vadd.f32 %v1090, %v1093
    %vm1095 = vweird.f32 %v1089
    %vm1096 = vweird.f32 %v1090
    %vm1097 = vmor %vm1095, %vm1096
    %v1098 = vsel %vm1097, %v1090, %v1094
    %v1099 = vand.u32 2147483647, %v1089
    %vm1100 = vcmp.eq.f32.partialorder %v1099, 8.507059e+37
    %v1101 = vand.u32 %v1089, 2147483648
    %v1102 = vor.u32 1.1754944e-38, %v1101
    %v1103 = vsel %vm1100, %v1102, %v1098
    %v1104 = vmul.f32 %v1086, %v1103
    %1105 = vrot.lane.b32.xlu0 %v71, 48
    %v1106 = vpop.permute.xlu0 %1105
    %v1109 = vsel %vm104, %v1104, 0
    %1111 = vmatpush.msra.mxu0 0.0
    %1112 = vmatpush.msra.mxu0 0.0
    %1113 = vmatpush.msra.mxu0 0.0
    %1114 = vmatpush.msra.mxu0 0.0
    %1115 = vmatpush.msra.mxu0 0.0
    %1116 = vmatpush.msra.mxu0 0.0
    %1117 = vmatpush.msra.mxu0 0.0
    %1118 = vmatpush.msra.mxu0 0.0
    %1119 = vmatpush.msra.mxu0 0.0
    %1120 = vmatpush.msra.mxu0 0.0
    %1121 = vmatpush.msra.mxu0 0.0
    %1122 = vmatpush.msra.mxu0 0.0
    %1123 = vmatpush.msra.mxu0 0.0
    %1124 = vmatpush.msra.mxu0 0.0
    %1125 = vmatpush.msra.mxu0 0.0
    %1126 = vmatpush.msra.mxu0 %v1106
    %1127 = vmatmul.f32.gmra.mxu0 %v1109
    %v1128 = vpop.f32.mrf.mxu0
    %v1129 = vadd.f32 0.0, %v1128
    %1130 = vdwg.mxu0
    %1131 = vrot.lane.b32.xlu0 %v74, 108
    %v1132 = vpop.permute.xlu0 %1131
    %1133 = vrot.lane.b32.xlu0 %v71, 76
    %v1134 = vpop.permute.xlu0 %1133
    %v1135 = vsel %vm78, %v1132, 0
    %v1137 = vsel %vm78, %v1134, 0
    %1139 = vmatpush.xpose.msra.mxu0 0.0
    %1140 = vmatpush.xpose.msra.mxu0 0.0
    %1141 = vmatpush.xpose.msra.mxu0 0.0
    %1142 = vmatpush.xpose.msra.mxu0 0.0
    %1143 = vmatpush.xpose.msra.mxu0 0.0
    %1144 = vmatpush.xpose.msra.mxu0 0.0
    %1145 = vmatpush.xpose.msra.mxu0 0.0
    %1146 = vmatpush.xpose.msra.mxu0 0.0
    %1147 = vmatpush.xpose.msra.mxu0 0.0
    %1148 = vmatpush.xpose.msra.mxu0 0.0
    %1149 = vmatpush.xpose.msra.mxu0 0.0
    %1150 = vmatpush.xpose.msra.mxu0 0.0
    %1151 = vmatpush.xpose.msra.mxu0 0.0
    %1152 = vmatpush.xpose.msra.mxu0 0.0
    %1153 = vmatpush.xpose.msra.mxu0 0.0
    %1154 = vmatpush.xpose.msra.mxu0 %v1137
    %1155 = vmatmul.f32.gmra.mxu0 %v1135
    %v1156 = vpop.f32.mrf.mxu0
    %v1157 = vadd.f32 0.0, %v1156
    %1158 = vdwg.mxu0
    %v1159 = vsel %vm104, %v1157, -inf
    %1160 = vmax.xlane.f32.xlu0 %v1159
    %v1161 = vpop.xlane.xlu0 %1160
    %v1162 = vsub.f32 %v1157, %v1161
    %v1163 = vmul.f32 %v1162, 1.442695
    %v1164 = vpow.pop %v1163
    %v1165 = vsel %vm104, %v1164, 0.0
    %1166 = vadd.xlane.f32.xlu0 %v1165
    %v1167 = vpop.xlane.xlu0 %1166
    %v1168 = vrcp.pop %v1167
    %v1169 = vmul.f32 %v1167, %v1168
    %v1170 = vsub.f32 1.0, %v1169
    %v1171 = vmul.f32 %v1168, %v1170
    %v1172 = vadd.f32 %v1168, %v1171
    %vm1173 = vweird.f32 %v1167
    %vm1174 = vweird.f32 %v1168
    %vm1175 = vmor %vm1173, %vm1174
    %v1176 = vsel %vm1175, %v1168, %v1172
    %v1177 = vand.u32 2147483647, %v1167
    %vm1178 = vcmp.eq.f32.partialorder %v1177, 8.507059e+37
    %v1179 = vand.u32 %v1167, 2147483648
    %v1180 = vor.u32 1.1754944e-38, %v1179
    %v1181 = vsel %vm1178, %v1180, %v1176
    %v1182 = vmul.f32 %v1164, %v1181
    %1183 = vrot.lane.b32.xlu0 %v71, 44
    %v1184 = vpop.permute.xlu0 %1183
    %v1187 = vsel %vm104, %v1182, 0
    %1189 = vmatpush.msra.mxu0 0.0
    %1190 = vmatpush.msra.mxu0 0.0
    %1191 = vmatpush.msra.mxu0 0.0
    %1192 = vmatpush.msra.mxu0 0.0
    %1193 = vmatpush.msra.mxu0 0.0
    %1194 = vmatpush.msra.mxu0 0.0
    %1195 = vmatpush.msra.mxu0 0.0
    %1196 = vmatpush.msra.mxu0 0.0
    %1197 = vmatpush.msra.mxu0 0.0
    %1198 = vmatpush.msra.mxu0 0.0
    %1199 = vmatpush.msra.mxu0 0.0
    %1200 = vmatpush.msra.mxu0 0.0
    %1201 = vmatpush.msra.mxu0 0.0
    %1202 = vmatpush.msra.mxu0 0.0
    %1203 = vmatpush.msra.mxu0 0.0
    %1204 = vmatpush.msra.mxu0 %v1184
    %1205 = vmatmul.f32.gmra.mxu0 %v1187
    %v1206 = vpop.f32.mrf.mxu0
    %v1207 = vadd.f32 0.0, %v1206
    %1208 = vdwg.mxu0
    %1209 = vrot.lane.b32.xlu0 %v74, 104
    %v1210 = vpop.permute.xlu0 %1209
    %1211 = vrot.lane.b32.xlu0 %v71, 72
    %v1212 = vpop.permute.xlu0 %1211
    %v1213 = vsel %vm78, %v1210, 0
    %v1215 = vsel %vm78, %v1212, 0
    %1217 = vmatpush.xpose.msra.mxu0 0.0
    %1218 = vmatpush.xpose.msra.mxu0 0.0
    %1219 = vmatpush.xpose.msra.mxu0 0.0
    %1220 = vmatpush.xpose.msra.mxu0 0.0
    %1221 = vmatpush.xpose.msra.mxu0 0.0
    %1222 = vmatpush.xpose.msra.mxu0 0.0
    %1223 = vmatpush.xpose.msra.mxu0 0.0
    %1224 = vmatpush.xpose.msra.mxu0 0.0
    %1225 = vmatpush.xpose.msra.mxu0 0.0
    %1226 = vmatpush.xpose.msra.mxu0 0.0
    %1227 = vmatpush.xpose.msra.mxu0 0.0
    %1228 = vmatpush.xpose.msra.mxu0 0.0
    %1229 = vmatpush.xpose.msra.mxu0 0.0
    %1230 = vmatpush.xpose.msra.mxu0 0.0
    %1231 = vmatpush.xpose.msra.mxu0 0.0
    %1232 = vmatpush.xpose.msra.mxu0 %v1215
    %1233 = vmatmul.f32.gmra.mxu0 %v1213
    %v1234 = vpop.f32.mrf.mxu0
    %v1235 = vadd.f32 0.0, %v1234
    %1236 = vdwg.mxu0
    %v1237 = vsel %vm104, %v1235, -inf
    %1238 = vmax.xlane.f32.xlu0 %v1237
    %v1239 = vpop.xlane.xlu0 %1238
    %v1240 = vsub.f32 %v1235, %v1239
    %v1241 = vmul.f32 %v1240, 1.442695
    %v1242 = vpow.pop %v1241
    %v1243 = vsel %vm104, %v1242, 0.0
    %1244 = vadd.xlane.f32.xlu0 %v1243
    %v1245 = vpop.xlane.xlu0 %1244
    %v1246 = vrcp.pop %v1245
    %v1247 = vmul.f32 %v1245, %v1246
    %v1248 = vsub.f32 1.0, %v1247
    %v1249 = vmul.f32 %v1246, %v1248
    %v1250 = vadd.f32 %v1246, %v1249
    %vm1251 = vweird.f32 %v1245
    %vm1252 = vweird.f32 %v1246
    %vm1253 = vmor %vm1251, %vm1252
    %v1254 = vsel %vm1253, %v1246, %v1250
    %v1255 = vand.u32 2147483647, %v1245
    %vm1256 = vcmp.eq.f32.partialorder %v1255, 8.507059e+37
    %v1257 = vand.u32 %v1245, 2147483648
    %v1258 = vor.u32 1.1754944e-38, %v1257
    %v1259 = vsel %vm1256, %v1258, %v1254
    %v1260 = vmul.f32 %v1242, %v1259
    %1261 = vrot.lane.b32.xlu0 %v71, 40
    %v1262 = vpop.permute.xlu0 %1261
    %v1265 = vsel %vm104, %v1260, 0
    %1267 = vmatpush.msra.mxu0 0.0
    %1268 = vmatpush.msra.mxu0 0.0
    %1269 = vmatpush.msra.mxu0 0.0
    %1270 = vmatpush.msra.mxu0 0.0
    %1271 = vmatpush.msra.mxu0 0.0
    %1272 = vmatpush.msra.mxu0 0.0
    %1273 = vmatpush.msra.mxu0 0.0
    %1274 = vmatpush.msra.mxu0 0.0
    %1275 = vmatpush.msra.mxu0 0.0
    %1276 = vmatpush.msra.mxu0 0.0
    %1277 = vmatpush.msra.mxu0 0.0
    %1278 = vmatpush.msra.mxu0 0.0
    %1279 = vmatpush.msra.mxu0 0.0
    %1280 = vmatpush.msra.mxu0 0.0
    %1281 = vmatpush.msra.mxu0 0.0
    %1282 = vmatpush.msra.mxu0 %v1262
    %1283 = vmatmul.f32.gmra.mxu0 %v1265
    %v1284 = vpop.f32.mrf.mxu0
    %v1285 = vadd.f32 0.0, %v1284
    %1286 = vdwg.mxu0
    %1287 = vrot.lane.b32.xlu0 %v74, 100
    %v1288 = vpop.permute.xlu0 %1287
    %1289 = vrot.lane.b32.xlu0 %v71, 68
    %v1290 = vpop.permute.xlu0 %1289
    %v1291 = vsel %vm78, %v1288, 0
    %v1293 = vsel %vm78, %v1290, 0
    %1295 = vmatpush.xpose.msra.mxu0 0.0
    %1296 = vmatpush.xpose.msra.mxu0 0.0
    %1297 = vmatpush.xpose.msra.mxu0 0.0
    %1298 = vmatpush.xpose.msra.mxu0 0.0
    %1299 = vmatpush.xpose.msra.mxu0 0.0
    %1300 = vmatpush.xpose.msra.mxu0 0.0
    %1301 = vmatpush.xpose.msra.mxu0 0.0
    %1302 = vmatpush.xpose.msra.mxu0 0.0
    %1303 = vmatpush.xpose.msra.mxu0 0.0
    %1304 = vmatpush.xpose.msra.mxu0 0.0
    %1305 = vmatpush.xpose.msra.mxu0 0.0
    %1306 = vmatpush.xpose.msra.mxu0 0.0
    %1307 = vmatpush.xpose.msra.mxu0 0.0
    %1308 = vmatpush.xpose.msra.mxu0 0.0
    %1309 = vmatpush.xpose.msra.mxu0 0.0
    %1310 = vmatpush.xpose.msra.mxu0 %v1293
    %1311 = vmatmul.f32.gmra.mxu0 %v1291
    %v1312 = vpop.f32.mrf.mxu0
    %v1313 = vadd.f32 0.0, %v1312
    %1314 = vdwg.mxu0
    %v1315 = vsel %vm104, %v1313, -inf
    %1316 = vmax.xlane.f32.xlu0 %v1315
    %v1317 = vpop.xlane.xlu0 %1316
    %v1318 = vsub.f32 %v1313, %v1317
    %v1319 = vmul.f32 %v1318, 1.442695
    %v1320 = vpow.pop %v1319
    %v1321 = vsel %vm104, %v1320, 0.0
    %1322 = vadd.xlane.f32.xlu0 %v1321
    %v1323 = vpop.xlane.xlu0 %1322
    %v1324 = vrcp.pop %v1323
    %v1325 = vmul.f32 %v1323, %v1324
    %v1326 = vsub.f32 1.0, %v1325
    %v1327 = vmul.f32 %v1324, %v1326
    %v1328 = vadd.f32 %v1324, %v1327
    %vm1329 = vweird.f32 %v1323
    %vm1330 = vweird.f32 %v1324
    %vm1331 = vmor %vm1329, %vm1330
    %v1332 = vsel %vm1331, %v1324, %v1328
    %v1333 = vand.u32 2147483647, %v1323
    %vm1334 = vcmp.eq.f32.partialorder %v1333, 8.507059e+37
    %v1335 = vand.u32 %v1323, 2147483648
    %v1336 = vor.u32 1.1754944e-38, %v1335
    %v1337 = vsel %vm1334, %v1336, %v1332
    %v1338 = vmul.f32 %v1320, %v1337
    %1339 = vrot.lane.b32.xlu0 %v71, 36
    %v1340 = vpop.permute.xlu0 %1339
    %v1343 = vsel %vm104, %v1338, 0
    %1345 = vmatpush.msra.mxu0 0.0
    %1346 = vmatpush.msra.mxu0 0.0
    %1347 = vmatpush.msra.mxu0 0.0
    %1348 = vmatpush.msra.mxu0 0.0
    %1349 = vmatpush.msra.mxu0 0.0
    %1350 = vmatpush.msra.mxu0 0.0
    %1351 = vmatpush.msra.mxu0 0.0
    %1352 = vmatpush.msra.mxu0 0.0
    %1353 = vmatpush.msra.mxu0 0.0
    %1354 = vmatpush.msra.mxu0 0.0
    %1355 = vmatpush.msra.mxu0 0.0
    %1356 = vmatpush.msra.mxu0 0.0
    %1357 = vmatpush.msra.mxu0 0.0
    %1358 = vmatpush.msra.mxu0 0.0
    %1359 = vmatpush.msra.mxu0 0.0
    %1360 = vmatpush.msra.mxu0 %v1340
    %1361 = vmatmul.f32.gmra.mxu0 %v1343
    %v1362 = vpop.f32.mrf.mxu0
    %v1363 = vadd.f32 0.0, %v1362
    %1364 = vdwg.mxu0
    %1366 = vrot.lane.b32.xlu0 %v895, 4
    %v1367 = vpop.permute.xlu0 %1366
    %1370 = vrot.lane.b32.xlu0 %v973, 8
    %v1371 = vpop.permute.xlu0 %1370
    %1374 = vrot.lane.b32.xlu0 %v1051, 12
    %v1375 = vpop.permute.xlu0 %1374
    %1378 = vrot.lane.b32.xlu0 %v1129, 16
    %v1379 = vpop.permute.xlu0 %1378
    %1382 = vrot.lane.b32.xlu0 %v1207, 20
    %v1383 = vpop.permute.xlu0 %1382
    %1386 = vrot.lane.b32.xlu0 %v1285, 24
    %v1387 = vpop.permute.xlu0 %1386
    %1390 = vrot.lane.b32.xlu0 %v1363, 28
    %v1391 = vpop.permute.xlu0 %1390
    %v1393 = vsel %vm78, %v817, %v1367
    %v1394 = vsel %vm104, %v1393, %v1371
    %v1395 = vsel %vm731, %v1394, %v1375
    %v1396 = vsel %vm733, %v1395, %v1379
    %v1397 = vsel %vm735, %v1396, %v1383
    %v1398 = vsel %vm737, %v1397, %v1387
    %v1399 = vsel %vm739, %v1398, %v1391
    %v1400 = vld [vmem:[%s3] sm:$0xff]
    %v1401 = vld [vmem:[%s3 + $0x8] sm:$0xff]
    %v1402 = vld [vmem:[%s3 + $0x10] sm:$0xff]
    %v1403 = vld [vmem:[%s3 + $0x18] sm:$0xff]
    %v1404 = vld [vmem:[%s4] sm:$0x1]
    %v1406 = vperm.slane %v1404, 0
    %v1409 = vsel %vm43, %v740, 0
    %v1412 = vsel %vm43, %v1399, 0
    %1414 = vmatpush.msra.mxu0 0.0
    %1415 = vmatpush.msra.mxu0 0.0
    %1416 = vmatpush.msra.mxu0 0.0
    %1417 = vmatpush.msra.mxu0 0.0
    %1418 = vmatpush.msra.mxu0 0.0
    %1419 = vmatpush.msra.mxu0 0.0
    %1420 = vmatpush.msra.mxu0 0.0
    %1421 = vmatpush.msra.mxu0 0.0
    %1422 = vmatpush.msra.mxu0 0.0
    %1423 = vmatpush.msra.mxu0 0.0
    %1424 = vmatpush.msra.mxu0 0.0
    %1425 = vmatpush.msra.mxu0 0.0
    %1426 = vmatpush.msra.mxu0 %v1403
    %1427 = vmatpush.msra.mxu0 %v1402
    %1428 = vmatpush.msra.mxu0 %v1401
    %1429 = vmatpush.msra.mxu0 %v1400
    %1430 = vmatmul.f32.gmra.mxu0 %v1409
    %v1431 = vpop.f32.mrf.mxu0
    %v1432 = vadd.f32 %v1406, %v1431
    %1433 = vmatmul.f32.gmra.mxu0 %v1412
    %v1434 = vpop.f32.mrf.mxu0
    %v1435 = vadd.f32 %v1406, %v1434
    %1436 = vdwg.mxu0
    %v1437 = vadd.f32 %v1432, %v33
    %v1438 = vadd.f32 %v1435, %v34
    %v1439 = vld [vmem:[%s5] sm:$0xff]
    %v1440 = vld [vmem:[%s5 + $0x8] sm:$0xff]
    %v1441 = vld [vmem:[%s5 + $0x10] sm:$0xff]
    %v1442 = vld [vmem:[%s5 + $0x18] sm:$0xff]
    %v1443 = vld [vmem:[%s5 + $0x20] sm:$0xff]
    %v1444 = vld [vmem:[%s5 + $0x28] sm:$0xff]
    %v1445 = vld [vmem:[%s5 + $0x30] sm:$0xff]
    %v1446 = vld [vmem:[%s5 + $0x38] sm:$0xff]
    %v1447 = vld [vmem:[%s6] sm:$0x3]
    %v1449 = vperm.slane %v1447, 0
    %v1450 = vperm.slane %v1447, 1
    %v1454 = vsel %vm43, %v1437, 0
    %v1457 = vsel %vm43, %v1438, 0
    %1459 = vmatpush.msra.mxu0 0.0
    %1460 = vmatpush.msra.mxu0 0.0
    %1461 = vmatpush.msra.mxu0 0.0
    %1462 = vmatpush.msra.mxu0 0.0
    %1463 = vmatpush.msra.mxu0 0.0
    %1464 = vmatpush.msra.mxu0 0.0
    %1465 = vmatpush.msra.mxu0 0.0
    %1466 = vmatpush.msra.mxu0 0.0
    %1467 = vmatpush.msra.mxu0 0.0
    %1468 = vmatpush.msra.mxu0 0.0
    %1469 = vmatpush.msra.mxu0 0.0
    %1470 = vmatpush.msra.mxu0 0.0
    %1471 = vmatpush.msra.mxu0 %v1445
    %1472 = vmatpush.msra.mxu0 %v1443
    %1473 = vmatpush.msra.mxu0 %v1441
    %1474 = vmatpush.msra.mxu0 %v1439
    %1475 = vmatmul.f32.gmra.mxu0 %v1454
    %v1476 = vpop.f32.mrf.mxu0
    %v1477 = vadd.f32 %v1449, %v1476
    %1478 = vmatmul.f32.gmra.mxu0 %v1457
    %v1479 = vpop.f32.mrf.mxu0
    %v1480 = vadd.f32 %v1449, %v1479
    %1481 = vdwg.mxu0
    %1482 = vmatpush.msra.mxu0 0.0
    %1483 = vmatpush.msra.mxu0 0.0
    %1484 = vmatpush.msra.mxu0 0.0
    %1485 = vmatpush.msra.mxu0 0.0
    %1486 = vmatpush.msra.mxu0 0.0
    %1487 = vmatpush.msra.mxu0 0.0
    %1488 = vmatpush.msra.mxu0 0.0
    %1489 = vmatpush.msra.mxu0 0.0
    %1490 = vmatpush.msra.mxu0 0.0
    %1491 = vmatpush.msra.mxu0 0.0
    %1492 = vmatpush.msra.mxu0 0.0
    %1493 = vmatpush.msra.mxu0 0.0
    %1494 = vmatpush.msra.mxu0 %v1446
    %1495 = vmatpush.msra.mxu0 %v1444
    %1496 = vmatpush.msra.mxu0 %v1442
    %1497 = vmatpush.msra.mxu0 %v1440
    %1498 = vmatmul.f32.gmra.mxu0 %v1454
    %v1499 = vpop.f32.mrf.mxu0
    %v1500 = vadd.f32 %v1450, %v1499
    %1501 = vmatmul.f32.gmra.mxu0 %v1457
    %v1502 = vpop.f32.mrf.mxu0
    %v1503 = vadd.f32 %v1450, %v1502
    %1504 = vdwg.mxu0
    %vm1505 = vcmp.gt.f32.partialorder %v1477, 0.0
    %vm1506 = vcmp.gt.f32.partialorder %v1500, 0.0
    %vm1507 = vcmp.gt.f32.partialorder %v1480, 0.0
    %vm1508 = vcmp.gt.f32.partialorder %v1503, 0.0
    %v1509 = vmul.f32 %v1477, 0.2
    %v1510 = vmul.f32 %v1500, 0.2
    %v1511 = vmul.f32 %v1480, 0.2
    %v1512 = vmul.f32 %v1503, 0.2
    %v1513 = vsel %vm1505, %v1477, %v1509
    %v1514 = vsel %vm1506, %v1500, %v1510
    %v1515 = vsel %vm1507, %v1480, %v1511
    %v1516 = vsel %vm1508, %v1503, %v1512
    %v1517 = vld [vmem:[%s7] sm:$0xff]
    %v1518 = vld [vmem:[%s7 + $0x8] sm:$0xff]
    %v1519 = vld [vmem:[%s7 + $0x10] sm:$0xff]
    %v1520 = vld [vmem:[%s7 + $0x18] sm:$0xff]
    %v1521 = vld [vmem:[%s7 + $0x20] sm:$0xff]
    %v1522 = vld [vmem:[%s7 + $0x28] sm:$0xff]
    %v1523 = vld [vmem:[%s7 + $0x30] sm:$0xff]
    %v1524 = vld [vmem:[%s7 + $0x38] sm:$0xff]
    %v1525 = vld [vmem:[%s7 + $0x40] sm:$0xff]
    %v1526 = vld [vmem:[%s7 + $0x48] sm:$0xff]
    %v1527 = vld [vmem:[%s7 + $0x50] sm:$0xff]
    %v1528 = vld [vmem:[%s7 + $0x58] sm:$0xff]
    %v1529 = vld [vmem:[%s7 + $0x60] sm:$0xff]
    %v1530 = vld [vmem:[%s7 + $0x68] sm:$0xff]
    %v1531 = vld [vmem:[%s7 + $0x70] sm:$0xff]
    %v1532 = vld [vmem:[%s7 + $0x78] sm:$0xff]
    %v1533 = vld [vmem:[%s7 + $0x80] sm:$0xff]
    %v1534 = vld [vmem:[%s7 + $0x88] sm:$0xff]
    %v1535 = vld [vmem:[%s7 + $0x90] sm:$0xff]
    %v1536 = vld [vmem:[%s7 + $0x98] sm:$0xff]
    %v1537 = vld [vmem:[%s7 + $0xa0] sm:$0xff]
    %v1538 = vld [vmem:[%s7 + $0xa8] sm:$0xff]
    %v1539 = vld [vmem:[%s7 + $0xb0] sm:$0xff]
    %v1540 = vld [vmem:[%s7 + $0xb8] sm:$0xff]
    %v1541 = vld [vmem:[%s7 + $0xc0] sm:$0xff]
    %v1542 = vld [vmem:[%s7 + $0xc8] sm:$0xff]
    %v1543 = vld [vmem:[%s7 + $0xd0] sm:$0xff]
    %v1544 = vld [vmem:[%s7 + $0xd8] sm:$0xff]
    %v1545 = vld [vmem:[%s7 + $0xe0] sm:$0xff]
    %v1546 = vld [vmem:[%s7 + $0xe8] sm:$0xff]
    %v1547 = vld [vmem:[%s7 + $0xf0] sm:$0xff]
    %v1548 = vld [vmem:[%s7 + $0xf8] sm:$0xff]
    %v1549 = vld [vmem:[%s8] sm:$0x1]
    %v1551 = vperm.slane %v1549, 0
    %1553 = vmatpush.msra.mxu0 %v1532
    %1554 = vmatpush.msra.mxu0 %v1531
    %1555 = vmatpush.msra.mxu0 %v1530
    %1556 = vmatpush.msra.mxu0 %v1529
    %1557 = vmatpush.msra.mxu0 %v1528
    %1558 = vmatpush.msra.mxu0 %v1527
    %1559 = vmatpush.msra.mxu0 %v1526
    %1560 = vmatpush.msra.mxu0 %v1525
    %1561 = vmatpush.msra.mxu0 %v1524
    %1562 = vmatpush.msra.mxu0 %v1523
    %1563 = vmatpush.msra.mxu0 %v1522
    %1564 = vmatpush.msra.mxu0 %v1521
    %1565 = vmatpush.msra.mxu0 %v1520
    %1566 = vmatpush.msra.mxu0 %v1519
    %1567 = vmatpush.msra.mxu0 %v1518
    %1568 = vmatpush.msra.mxu0 %v1517
    %1569 = vmatmul.f32.gmra.mxu0 %v1513
    %v1570 = vpop.f32.mrf.mxu0
    %v1571 = vadd.f32 %v1551, %v1570
    %1572 = vmatmul.f32.gmra.mxu0 %v1515
    %v1573 = vpop.f32.mrf.mxu0
    %v1574 = vadd.f32 %v1551, %v1573
    %1575 = vdwg.mxu0
    %1576 = vmatpush.msra.mxu0 %v1548
    %1577 = vmatpush.msra.mxu0 %v1547
    %1578 = vmatpush.msra.mxu0 %v1546
    %1579 = vmatpush.msra.mxu0 %v1545
    %1580 = vmatpush.msra.mxu0 %v1544
    %1581 = vmatpush.msra.mxu0 %v1543
    %1582 = vmatpush.msra.mxu0 %v1542
    %1583 = vmatpush.msra.mxu0 %v1541
    %1584 = vmatpush.msra.mxu0 %v1540
    %1585 = vmatpush.msra.mxu0 %v1539
    %1586 = vmatpush.msra.mxu0 %v1538
    %1587 = vmatpush.msra.mxu0 %v1537
    %1588 = vmatpush.msra.mxu0 %v1536
    %1589 = vmatpush.msra.mxu0 %v1535
    %1590 = vmatpush.msra.mxu0 %v1534
    %1591 = vmatpush.msra.mxu0 %v1533
    %1592 = vmatmul.f32.gmra.mxu0 %v1514
    %v1593 = vpop.f32.mrf.mxu0
    %v1594 = vadd.f32 %v1571, %v1593
    %1595 = vmatmul.f32.gmra.mxu0 %v1516
    %v1596 = vpop.f32.mrf.mxu0
    %v1597 = vadd.f32 %v1574, %v1596
    %1598 = vdwg.mxu0
    %vm1599 = vcmp.gt.f32.partialorder %v1594, 0.0
    %vm1600 = vcmp.gt.f32.partialorder %v1597, 0.0
    %v1601 = vmul.f32 %v1594, 0.2
    %v1602 = vmul.f32 %v1597, 0.2
    %v1603 = vsel %vm1599, %v1594, %v1601
    %v1604 = vsel %vm1600, %v1597, %v1602
    %v1605 = vadd.f32 %v1437, %v1603
    %v1606 = vadd.f32 %v1438, %v1604
    %1607 = vst.msk [vmem:[#allocation2] sm:$0xff] %vm43, %v1605
    %1608 = vst.msk [vmem:[#allocation2 + $0x8] sm:$0xff] %vm43, %v1606
    // Predicated region
    $region38: #{tpu_custom_call.1} parent=1 // pred_check
      _
    $region39: #{tpu_custom_call.1} parent=1 // pred_check_branch
      %1610 = sbr.rel (0) target = $region41
    $region40: #{tpu_custom_call.1} parent=1 // pred_region
      %1612 = vsyncadd [#allocation3], 0
      %s1613 = sshll.u32 [#allocation2], 4
      %s1614 = int_to_ptr.vmem [resolvable:$true] %s1613
      %s1615 = sshll.u32 %s9, 4
      %s1616 = int_to_ptr.hbm [resolvable:$true] %s1615
      %1621 = dma.vmem_to_hbm [thread:$0]  %s1614, 256, %s1616, [#allocation3], 128, 128, 8
    $region41: #{tpu_custom_call.1} parent=1 // pred_fallthru
      _
    // Predicated region
    $region42: #{tpu_custom_call.1} parent=1 // pred_check
      _
    $region43: #{tpu_custom_call.1} parent=1 // pred_check_branch
      %1623 = sbr.rel (0) target = $region45
    $region44: #{tpu_custom_call.1} parent=1 // pred_region
      %1625 = dma.done [#allocation3], 256
    $region45: #{tpu_custom_call.1} parent=1 // pred_fallthru
      _
    %1626 = vsyncpa [#allocation3], 1

</llo_original>
